<compile_context>
chip_gen: v7x
topology: tpu7x:2x2x1
jax: 0.10.0
libtpu: 0.0.40
codegen_flags: <defaults>
</compile_context>

<pallas_src>
import jax
import jax.numpy as jnp
from jax import lax
from jax.experimental import pallas as pl
from jax.experimental.pallas import tpu as pltpu


def _vmem_limit_bytes():
    cap = 128 * 1024 * 1024
    try:
        info = pltpu.get_tpu_info()
        cap = int(getattr(info, "vmem_capacity_bytes", cap))
    except Exception:
        pass
    if cap <= 64 * 1024 * 1024:            # v7x-class part: leave headroom
        return 40 * 1024 * 1024
    return min(int(cap * 3 // 4), 100 * 1024 * 1024)


_VMEM_LIMIT = _vmem_limit_bytes()


def _pick_tile(m, cands=(1024, 512, 256, 128, 64, 32, 16, 8)):
    for c in cands:
        if c <= m and m % c == 0:
            return c
    return m


# ----------------------------------------------------------------------------
# UpPreTransformation (pure data movement -> plain JAX glue).
# ----------------------------------------------------------------------------
def up_pre_transform(x, up_factor):
    assert up_factor % 2 == 0
    stride = up_factor
    padding = up_factor * 2 - up_factor // 2 - 1
    internal = stride - 1
    b, h, w, c = x.shape
    H = h + internal * (h - 1) + 2 * padding
    W = w + internal * (w - 1) + 2 * padding
    base = jnp.zeros((b, H, W, c), x.dtype)
    return base.at[:, padding:H - padding:stride,
                   padding:W - padding:stride, :].set(x)


# ----------------------------------------------------------------------------
# Linear (x @ W + b), tiled over rows.  W is expected in bf16 (f32 accumulate).
# ----------------------------------------------------------------------------
def linear_pallas(x2d, w, b):
    M, Kin = x2d.shape
    Kin2, Nout = w.shape
    assert Kin == Kin2
    b2 = b.astype(jnp.float32).reshape(1, Nout)
    tm = _pick_tile(M)

    def kernel_fn(x_ref, w_ref, b_ref, o_ref):
        acc = jnp.dot(x_ref[...].astype(jnp.bfloat16), w_ref[...],
                      preferred_element_type=jnp.float32)
        o_ref[...] = (acc + b_ref[...]).astype(o_ref.dtype)

    cost = pl.CostEstimate(
        flops=int(2 * M * Kin * Nout), transcendentals=0,
        bytes_accessed=int(4 * M * Kin + 2 * Kin * Nout + 4 * M * Nout))

    return pl.pallas_call(
        kernel_fn,
        out_shape=jax.ShapeDtypeStruct((M, Nout), jnp.float32),
        grid=(M // tm,),
        in_specs=[pl.BlockSpec((tm, Kin), lambda i: (i, 0)),
                  pl.BlockSpec((Kin, Nout), lambda i: (0, 0)),
                  pl.BlockSpec((1, Nout), lambda i: (0, 0))],
        out_specs=pl.BlockSpec((tm, Nout), lambda i: (i, 0)),
        compiler_params=pltpu.CompilerParams(
            dimension_semantics=("parallel",),
            vmem_limit_bytes=_VMEM_LIMIT),
        cost_estimate=cost,
    )(x2d, w, b2)


# ----------------------------------------------------------------------------
# Exact-accuracy erf (A&S 7.1.26, |err| <= 1.5e-7) from Mosaic-safe ops.
# ----------------------------------------------------------------------------
def _erf(x):
    a1, a2, a3, a4, a5 = (0.254829592, -0.284496736, 1.421413741,
                          -1.453152027, 1.061405429)
    p = 0.3275911
    ax = jnp.abs(x)
    t = 1.0 / (1.0 + p * ax)
    poly = ((((a5 * t + a4) * t + a3) * t + a2) * t + a1) * t
    y = 1.0 - poly * jnp.exp(-ax * ax)
    return jnp.where(x < 0.0, -y, y)


# ----------------------------------------------------------------------------
# Depthwise conv (k=K, stride=1, pad=0, groups=C) + bias + LayerNorm + GELU.
# ----------------------------------------------------------------------------
def dwconv_ln_gelu_pallas(x, w, b, gamma, beta, eps=1e-6):
    N, Hp, Wp, C = x.shape
    KH, KW, _ = w.shape
    Ho, Wo = Hp - KH + 1, Wp - KW + 1

    def kernel_fn(x_ref, w_ref, b_ref, g_ref, be_ref, o_ref):
        xb = x_ref[0]                                     # (Hp, Wp, C)
        acc = jnp.zeros((Ho, Wo, C), jnp.float32)
        for ky in range(KH):
            for kx in range(KW):
                acc = acc + xb[ky:ky + Ho, kx:kx + Wo, :] * \
                    w_ref[ky:ky + 1, kx:kx + 1, :]
        acc = acc + b_ref[...]
        mean = jnp.mean(acc, axis=-1, keepdims=True)
        var = jnp.mean(jnp.square(acc - mean), axis=-1, keepdims=True)
        y = (acc - mean) * lax.rsqrt(var + eps)
        y = y * g_ref[...] + be_ref[...]
        y = 0.5 * y * (1.0 + _erf(y * 0.7071067811865476))   # exact-erf GELU
        o_ref[0] = y.astype(o_ref.dtype)

    cost = pl.CostEstimate(
        flops=int(N * Ho * Wo * C * (2 * KH * KW + 24)),
        transcendentals=int(N * Ho * Wo * C),
        bytes_accessed=int(4 * (N * Hp * Wp * C + N * Ho * Wo * C
                                + KH * KW * C + 3 * C)))

    return pl.pallas_call(
        kernel_fn,
        out_shape=jax.ShapeDtypeStruct((N, Ho, Wo, C), jnp.float32),
        grid=(N,),
        in_specs=[pl.BlockSpec((1, Hp, Wp, C), lambda n: (n, 0, 0, 0)),
                  pl.BlockSpec((KH, KW, C), lambda n: (0, 0, 0)),
                  pl.BlockSpec((1, C), lambda n: (0, 0)),
                  pl.BlockSpec((1, C), lambda n: (0, 0)),
                  pl.BlockSpec((1, C), lambda n: (0, 0))],
        out_specs=pl.BlockSpec((1, Ho, Wo, C), lambda n: (n, 0, 0, 0)),
        compiler_params=pltpu.CompilerParams(
            dimension_semantics=("parallel",),
            vmem_limit_bytes=_VMEM_LIMIT),
        cost_estimate=cost,
    )(x, w, b.reshape(1, C), gamma.reshape(1, C), beta.reshape(1, C))


# ----------------------------------------------------------------------------
# Fused offset + mask head: one lane-dense linear (Nout = 3*G*P) with the
# per-group softmax over P folded into the kernel epilogue.  Output column
# layout: [ offsets (2*G*P, (g,p)-major, (x,y) minor) | attn (G*P) ].
# ----------------------------------------------------------------------------
def offset_mask_head_pallas(x2d, w_off, b_off, w_msk, b_msk, *, group, points):
    M, C = x2d.shape
    GP = group * points
    SL = 3 * GP
    w_om = jnp.concatenate([w_off, w_msk], axis=1).astype(jnp.bfloat16)
    b_om = jnp.concatenate([b_off, b_msk], axis=0).astype(jnp.float32)
    b_om = b_om.reshape(1, SL)
    tm = _pick_tile(M)

    def kernel_fn(x_ref, w_ref, b_ref, o_ref):
        om = jnp.dot(x_ref[...].astype(jnp.bfloat16), w_ref[...],
                     preferred_element_type=jnp.float32) + b_ref[...]
        pieces = [om[:, :2 * GP]]                    # offsets pass through
        for g in range(group):
            ml = om[:, 2 * GP + g * points:2 * GP + (g + 1) * points]
            mx = jnp.max(ml, axis=-1, keepdims=True)
            e = jnp.exp(ml - mx)
            pieces.append(e / jnp.sum(e, axis=-1, keepdims=True))
        o_ref[...] = jnp.concatenate(pieces, axis=-1).astype(o_ref.dtype)

    cost = pl.CostEstimate(
        flops=int(2 * M * C * SL + 8 * M * GP),
        transcendentals=int(M * GP),
        bytes_accessed=int(4 * (M * C + M * SL) + 2 * C * SL))

    return pl.pallas_call(
        kernel_fn,
        out_shape=jax.ShapeDtypeStruct((M, SL), jnp.float32),
        grid=(M // tm,),
        in_specs=[pl.BlockSpec((tm, C), lambda i: (i, 0)),
                  pl.BlockSpec((C, SL), lambda i: (0, 0)),
                  pl.BlockSpec((1, SL), lambda i: (0, 0))],
        out_specs=pl.BlockSpec((tm, SL), lambda i: (i, 0)),
        compiler_params=pltpu.CompilerParams(
            dimension_semantics=("parallel",),
            vmem_limit_bytes=_VMEM_LIMIT),
        cost_estimate=cost,
    )(x2d, w_om, b_om)


# ----------------------------------------------------------------------------
# DCNv3 deformable-sampling core with:
#   * P-sum folded into the per-group weight matrix B(q, s_small),
#   * contraction only over the h*w lattice of real samples (xd) plus an
#     analytic rank-1 b_in correction (clamped hat-sum, zero padding exact),
#   * both reference flips folded into the mirrored reference point,
#   * fused output projection (w_out, b_out) in the epilogue.
# samp layout (per query row): [off (2*G*P, (g,p)-major,(x,y)-minor) | attn (G*P)].
# ----------------------------------------------------------------------------
def dcnv3_core_pallas(samp, xd4, bin_g, w_out_bf16, b_out, *,
                      H_in, W_in, H_out, W_out, h_small, w_small, up, lat_pad,
                      kernel, group, group_channels, dilation=1,
                      offset_scale=1.0):
    N, Q, SL = samp.shape
    K, G, Gc = kernel, group, group_channels
    P = K * K
    C = G * Gc
    hw = h_small * w_small
    assert SL == 3 * G * P and Q == H_out * W_out
    assert xd4.shape == (N, G, hw, Gc)
    kbase = (dilation * (K - 1)) // 2
    kbase2 = dilation * (K - 1) - kbase          # mirrored-frame base offset

    tq = _pick_tile(Q, (256, 128, 64, 32, 16, 8))
    n_qt = Q // tq

    def kernel_fn(s_ref, x_ref, bi_ref, wo_ref, bo_ref, o_ref):
        sp = s_ref[0]                                          # (tq, 3GP)
        q = pl.program_id(1) * tq + lax.broadcasted_iota(jnp.int32, (tq, 1), 0)
        Yf = (q // W_out).astype(jnp.float32)
        Xf = (q % W_out).astype(jnp.float32)
        lat = lax.broadcasted_iota(jnp.int32, (1, hw), 1)
        ylat = (lat_pad + up * (lat // w_small)).astype(jnp.float32)
        xlat = (lat_pad + up * (lat % w_small)).astype(jnp.float32)

        parts = []
        for g in range(G):
            B = jnp.zeros((tq, hw), jnp.float32)
            rs = jnp.zeros((tq, 1), jnp.float32)
            for p in range(P):
                kyo = float((p % K) * dilation - kbase)
                kxo = float((p // K) * dilation - kbase)
                c0 = 2 * (g * P + p)
                ca = 2 * G * P + g * P + p
                offx = sp[:, c0:c0 + 1]
                offy = sp[:, c0 + 1:c0 + 2]
                attn = sp[:, ca:ca + 1]
                # mirrored reference point (folds both flips of the module)
                pym = (Yf + (kbase2 - offset_scale * kyo)) - offset_scale * offy
                pxm = (Xf + (kbase2 - offset_scale * kxo)) - offset_scale * offx
                hy = jnp.maximum(1.0 - jnp.abs(pym - ylat), 0.0)   # (tq, hw)
                hx = jnp.maximum(1.0 - jnp.abs(pxm - xlat), 0.0)
                B = B + (attn * hy) * hx
                # in-bounds hat mass (zero padding) for the constant b_in term
                sy = jnp.clip(jnp.minimum(pym + 1.0, H_in - pym), 0.0, 1.0)
                sx = jnp.clip(jnp.minimum(pxm + 1.0, W_in - pxm), 0.0, 1.0)
                rs = rs + attn * (sy * sx)
            part = jnp.dot(B, x_ref[0, g], preferred_element_type=jnp.float32)
            part = part + rs * bi_ref[g:g + 1, :]
            parts.append(part)

        feat = jnp.concatenate(parts, axis=-1)                 # (tq, C)
        y = jnp.dot(feat.astype(jnp.bfloat16), wo_ref[...],
                    preferred_element_type=jnp.float32) + bo_ref[...]
        o_ref[0] = y.astype(o_ref.dtype)

    cost = pl.CostEstimate(
        flops=int(N * Q * (10 * G * P * hw + 2 * G * hw * Gc + 2 * C * C)),
        transcendentals=0,
        bytes_accessed=int(4 * (N * Q * SL + N * Q * C)
                           + 4 * N * G * hw * Gc * n_qt + 2 * C * C))

    return pl.pallas_call(
        kernel_fn,
        out_shape=jax.ShapeDtypeStruct((N, Q, C), jnp.float32),
        grid=(N, n_qt),
        in_specs=[pl.BlockSpec((1, tq, SL), lambda n, qi: (n, qi, 0)),
                  pl.BlockSpec((1, G, hw, Gc), lambda n, qi: (n, 0, 0, 0)),
                  pl.BlockSpec((G, Gc), lambda n, qi: (0, 0)),
                  pl.BlockSpec((C, C), lambda n, qi: (0, 0)),
                  pl.BlockSpec((1, C), lambda n, qi: (0, 0))],
        out_specs=pl.BlockSpec((1, tq, C), lambda n, qi: (n, qi, 0)),
        compiler_params=pltpu.CompilerParams(
            dimension_semantics=("parallel", "parallel"),
            vmem_limit_bytes=_VMEM_LIMIT),
        cost_estimate=cost,
    )(samp, xd4, bin_g, w_out_bf16, b_out.astype(jnp.float32).reshape(1, C))


# ----------------------------------------------------------------------------
# Full DCNv3_Up forward
# ----------------------------------------------------------------------------
def dcnv3_up_forward(x, params, *, channels, group, up_factor, offset_scale=1.0):
    C, G = channels, group
    K = up_factor * 2                       # kernel_size == dw_kernel_size
    P = K * K
    Gc = C // G
    N, h, w, _ = x.shape
    lat_pad = up_factor * 2 - up_factor // 2 - 1

    # --- flipped-frame trick: only the tiny input / dw weights are flipped ---
    xf = jnp.flip(x, (1, 2))
    wdw_f = jnp.flip(params["w_dw"], (0, 1))

    # depthwise conv (+bias) + LayerNorm(1e-6) + exact-erf GELU on the
    # zero-inserted flipped input  -> x1' = flip(x1), i.e. final raster order.
    t = up_pre_transform(xf, up_factor)
    x1 = dwconv_ln_gelu_pallas(t, wdw_f, params["b_dw"],
                               params["ln_g"], params["ln_b"])
    _, Ho, Wo, _ = x1.shape
    Q = Ho * Wo
    Hin, Win = t.shape[1], t.shape[2]

    # fused offset + mask head (softmax over P per group inside the kernel)
    samp = offset_mask_head_pallas(x1.reshape(-1, C),
                                   params["w_off"], params["b_off"],
                                   params["w_msk"], params["b_msk"],
                                   group=G, points=P)
    samp = samp.reshape(N, Q, 3 * G * P)

    # input projection on the small (unflipped) input; the zero-inserted
    # x_proj is never built: lattice deltas xd = x @ w_in (= proj - b_in).
    xd = linear_pallas(x.reshape(-1, C), params["w_in"].astype(jnp.bfloat16),
                       jnp.zeros((C,), jnp.float32))
    xd4 = xd.reshape(N, h * w, G, Gc).transpose(0, 2, 1, 3)   # (N, G, hw, Gc)

    out = dcnv3_core_pallas(samp, xd4, params["b_in"].reshape(G, Gc),
                            params["w_out"].astype(jnp.bfloat16),
                            params["b_out"],
                            H_in=Hin, W_in=Win, H_out=Ho, W_out=Wo,
                            h_small=h, w_small=w, up=up_factor,
                            lat_pad=lat_pad, kernel=K, group=G,
                            group_channels=Gc, dilation=1,
                            offset_scale=offset_scale)
    return out.reshape(N, Ho, Wo, C)


# ----------------------------------------------------------------------------
if __name__ == "__main__":
    key = jax.random.PRNGKey(0)
    N, h, w = 2, 4, 4
    C, G, up = 32, 4, 2
    K = up * 2
    ks = jax.random.split(key, 10)

    x = jax.random.normal(ks[0], (N, h, w, C), jnp.float32)

    params = dict(
        # depthwise conv weights stored as (KH, KW, C); LN affine params
        w_dw=0.1 * jax.random.normal(ks[1], (K, K, C), jnp.float32),
        b_dw=0.05 * jax.random.normal(ks[2], (C,), jnp.float32),
        ln_g=jnp.ones((C,), jnp.float32),
        ln_b=jnp.zeros((C,), jnp.float32),
        # input / output projections (xavier-ish).  The module zero-inits the
        # biases; b_in is set nonzero here to exercise the analytic rank-1
        # bias-correction path in the core.
        w_in=jax.random.normal(ks[3], (C, C), jnp.float32) / jnp.sqrt(C),
        b_in=0.05 * jax.random.normal(ks[8], (C,), jnp.float32),
        w_out=jax.random.normal(ks[4], (C, C), jnp.float32) / jnp.sqrt(C),
        b_out=jnp.zeros((C,), jnp.float32),
        # NOTE: the module zero-inits offset/mask; small deterministic random
        # values are used so the deformable bilinear-sampling path is exercised.
        w_off=0.05 * jax.random.normal(ks[5], (C, G * K * K * 2), jnp.float32),
        b_off=0.05 * jax.random.normal(ks[6], (G * K * K * 2,), jnp.float32),
        w_msk=0.1 * jax.random.normal(ks[7], (C, G * K * K), jnp.float32),
        b_msk=jnp.zeros((G * K * K,), jnp.float32),
    )

    out = dcnv3_up_forward(x, params, channels=C, group=G, up_factor=up,
                           offset_scale=1.0)
    out = jax.block_until_ready(out)

    assert out.shape == (N, up * h, up * w, C), out.shape
    assert bool(jnp.all(jnp.isfinite(out)))
    print("KERNEL_OK")
</pallas_src>

<mosaic_0001>
module attributes {stable_mosaic.version = 11 : i64} {
  func.func @kernel_fn(%arg0: i32, %arg1: memref<1x11x11x32xf32, #tpu.memory_space<vmem>>, %arg2: memref<4x4x32xf32, #tpu.memory_space<vmem>>, %arg3: memref<1x32xf32, #tpu.memory_space<vmem>>, %arg4: memref<1x32xf32, #tpu.memory_space<vmem>>, %arg5: memref<1x32xf32, #tpu.memory_space<vmem>>, %arg6: memref<1x8x8x32xf32, #tpu.memory_space<vmem>>) attributes {dimension_semantics = [#tpu.dimension_semantics<parallel>], iteration_bounds = array<i64: 2>, scalar_prefetch = 0 : i64, scratch_operands = 0 : i64, tpu.core_type = #tpu.core_type<tc>, window_params = [{transform_indices = @transform_0, window_bounds = array<i64: 1, 11, 11, 32>}, {pipeline_mode = #tpu.pipeline_mode<synchronous>, transform_indices = @transform_1, window_bounds = array<i64: 4, 4, 32>}, {pipeline_mode = #tpu.pipeline_mode<synchronous>, transform_indices = @transform_2, window_bounds = array<i64: 1, 32>}, {pipeline_mode = #tpu.pipeline_mode<synchronous>, transform_indices = @transform_3, window_bounds = array<i64: 1, 32>}, {pipeline_mode = #tpu.pipeline_mode<synchronous>, transform_indices = @transform_4, window_bounds = array<i64: 1, 32>}, {transform_indices = @transform_5, window_bounds = array<i64: 1, 8, 8, 32>}]} {
    %c0 = arith.constant 0 : index
    %c0_0 = arith.constant 0 : index
    %c0_1 = arith.constant 0 : index
    %c0_2 = arith.constant 0 : index
    %0 = vector.load %arg1[%c0, %c0_0, %c0_1, %c0_2] : memref<1x11x11x32xf32, #tpu.memory_space<vmem>>, vector<1x11x11x32xf32>
    %1 = vector.shape_cast %0 : vector<1x11x11x32xf32> to vector<11x11x32xf32>
    %cst = arith.constant 0.000000e+00 : f32
    %2 = vector.broadcast %cst : f32 to vector<8x8x32xf32>
    %3 = vector.extract_strided_slice %1 {offsets = [0, 0, 0], sizes = [8, 8, 32], strides = [1, 1, 1]} : vector<11x11x32xf32> to vector<8x8x32xf32>
    %c0_3 = arith.constant 0 : index
    %c0_4 = arith.constant 0 : index
    %c0_5 = arith.constant 0 : index
    %4 = vector.load %arg2[%c0_3, %c0_4, %c0_5] : memref<4x4x32xf32, #tpu.memory_space<vmem>>, vector<1x1x32xf32>
    %5 = vector.broadcast %4 : vector<1x1x32xf32> to vector<8x8x32xf32>
    %6 = arith.mulf %3, %5 : vector<8x8x32xf32>
    %7 = arith.addf %2, %6 : vector<8x8x32xf32>
    %8 = vector.extract_strided_slice %1 {offsets = [0, 1, 0], sizes = [8, 8, 32], strides = [1, 1, 1]} : vector<11x11x32xf32> to vector<8x8x32xf32>
    %c0_6 = arith.constant 0 : index
    %c1 = arith.constant 1 : index
    %c0_7 = arith.constant 0 : index
    %9 = vector.load %arg2[%c0_6, %c1, %c0_7] : memref<4x4x32xf32, #tpu.memory_space<vmem>>, vector<1x1x32xf32>
    %10 = vector.broadcast %9 : vector<1x1x32xf32> to vector<8x8x32xf32>
    %11 = arith.mulf %8, %10 : vector<8x8x32xf32>
    %12 = arith.addf %7, %11 : vector<8x8x32xf32>
    %13 = vector.extract_strided_slice %1 {offsets = [0, 2, 0], sizes = [8, 8, 32], strides = [1, 1, 1]} : vector<11x11x32xf32> to vector<8x8x32xf32>
    %c0_8 = arith.constant 0 : index
    %c2 = arith.constant 2 : index
    %c0_9 = arith.constant 0 : index
    %14 = vector.load %arg2[%c0_8, %c2, %c0_9] : memref<4x4x32xf32, #tpu.memory_space<vmem>>, vector<1x1x32xf32>
    %15 = vector.broadcast %14 : vector<1x1x32xf32> to vector<8x8x32xf32>
    %16 = arith.mulf %13, %15 : vector<8x8x32xf32>
    %17 = arith.addf %12, %16 : vector<8x8x32xf32>
    %18 = vector.extract_strided_slice %1 {offsets = [0, 3, 0], sizes = [8, 8, 32], strides = [1, 1, 1]} : vector<11x11x32xf32> to vector<8x8x32xf32>
    %c0_10 = arith.constant 0 : index
    %c3 = arith.constant 3 : index
    %c0_11 = arith.constant 0 : index
    %19 = vector.load %arg2[%c0_10, %c3, %c0_11] : memref<4x4x32xf32, #tpu.memory_space<vmem>>, vector<1x1x32xf32>
    %20 = vector.broadcast %19 : vector<1x1x32xf32> to vector<8x8x32xf32>
    %21 = arith.mulf %18, %20 : vector<8x8x32xf32>
    %22 = arith.addf %17, %21 : vector<8x8x32xf32>
    %23 = vector.extract_strided_slice %1 {offsets = [1, 0, 0], sizes = [8, 8, 32], strides = [1, 1, 1]} : vector<11x11x32xf32> to vector<8x8x32xf32>
    %c1_12 = arith.constant 1 : index
    %c0_13 = arith.constant 0 : index
    %c0_14 = arith.constant 0 : index
    %24 = vector.load %arg2[%c1_12, %c0_13, %c0_14] : memref<4x4x32xf32, #tpu.memory_space<vmem>>, vector<1x1x32xf32>
    %25 = vector.broadcast %24 : vector<1x1x32xf32> to vector<8x8x32xf32>
    %26 = arith.mulf %23, %25 : vector<8x8x32xf32>
    %27 = arith.addf %22, %26 : vector<8x8x32xf32>
    %28 = vector.extract_strided_slice %1 {offsets = [1, 1, 0], sizes = [8, 8, 32], strides = [1, 1, 1]} : vector<11x11x32xf32> to vector<8x8x32xf32>
    %c1_15 = arith.constant 1 : index
    %c1_16 = arith.constant 1 : index
    %c0_17 = arith.constant 0 : index
    %29 = vector.load %arg2[%c1_15, %c1_16, %c0_17] : memref<4x4x32xf32, #tpu.memory_space<vmem>>, vector<1x1x32xf32>
    %30 = vector.broadcast %29 : vector<1x1x32xf32> to vector<8x8x32xf32>
    %31 = arith.mulf %28, %30 : vector<8x8x32xf32>
    %32 = arith.addf %27, %31 : vector<8x8x32xf32>
    %33 = vector.extract_strided_slice %1 {offsets = [1, 2, 0], sizes = [8, 8, 32], strides = [1, 1, 1]} : vector<11x11x32xf32> to vector<8x8x32xf32>
    %c1_18 = arith.constant 1 : index
    %c2_19 = arith.constant 2 : index
    %c0_20 = arith.constant 0 : index
    %34 = vector.load %arg2[%c1_18, %c2_19, %c0_20] : memref<4x4x32xf32, #tpu.memory_space<vmem>>, vector<1x1x32xf32>
    %35 = vector.broadcast %34 : vector<1x1x32xf32> to vector<8x8x32xf32>
    %36 = arith.mulf %33, %35 : vector<8x8x32xf32>
    %37 = arith.addf %32, %36 : vector<8x8x32xf32>
    %38 = vector.extract_strided_slice %1 {offsets = [1, 3, 0], sizes = [8, 8, 32], strides = [1, 1, 1]} : vector<11x11x32xf32> to vector<8x8x32xf32>
    %c1_21 = arith.constant 1 : index
    %c3_22 = arith.constant 3 : index
    %c0_23 = arith.constant 0 : index
    %39 = vector.load %arg2[%c1_21, %c3_22, %c0_23] : memref<4x4x32xf32, #tpu.memory_space<vmem>>, vector<1x1x32xf32>
    %40 = vector.broadcast %39 : vector<1x1x32xf32> to vector<8x8x32xf32>
    %41 = arith.mulf %38, %40 : vector<8x8x32xf32>
    %42 = arith.addf %37, %41 : vector<8x8x32xf32>
    %43 = vector.extract_strided_slice %1 {offsets = [2, 0, 0], sizes = [8, 8, 32], strides = [1, 1, 1]} : vector<11x11x32xf32> to vector<8x8x32xf32>
    %c2_24 = arith.constant 2 : index
    %c0_25 = arith.constant 0 : index
    %c0_26 = arith.constant 0 : index
    %44 = vector.load %arg2[%c2_24, %c0_25, %c0_26] : memref<4x4x32xf32, #tpu.memory_space<vmem>>, vector<1x1x32xf32>
    %45 = vector.broadcast %44 : vector<1x1x32xf32> to vector<8x8x32xf32>
    %46 = arith.mulf %43, %45 : vector<8x8x32xf32>
    %47 = arith.addf %42, %46 : vector<8x8x32xf32>
    %48 = vector.extract_strided_slice %1 {offsets = [2, 1, 0], sizes = [8, 8, 32], strides = [1, 1, 1]} : vector<11x11x32xf32> to vector<8x8x32xf32>
    %c2_27 = arith.constant 2 : index
    %c1_28 = arith.constant 1 : index
    %c0_29 = arith.constant 0 : index
    %49 = vector.load %arg2[%c2_27, %c1_28, %c0_29] : memref<4x4x32xf32, #tpu.memory_space<vmem>>, vector<1x1x32xf32>
    %50 = vector.broadcast %49 : vector<1x1x32xf32> to vector<8x8x32xf32>
    %51 = arith.mulf %48, %50 : vector<8x8x32xf32>
    %52 = arith.addf %47, %51 : vector<8x8x32xf32>
    %53 = vector.extract_strided_slice %1 {offsets = [2, 2, 0], sizes = [8, 8, 32], strides = [1, 1, 1]} : vector<11x11x32xf32> to vector<8x8x32xf32>
    %c2_30 = arith.constant 2 : index
    %c2_31 = arith.constant 2 : index
    %c0_32 = arith.constant 0 : index
    %54 = vector.load %arg2[%c2_30, %c2_31, %c0_32] : memref<4x4x32xf32, #tpu.memory_space<vmem>>, vector<1x1x32xf32>
    %55 = vector.broadcast %54 : vector<1x1x32xf32> to vector<8x8x32xf32>
    %56 = arith.mulf %53, %55 : vector<8x8x32xf32>
    %57 = arith.addf %52, %56 : vector<8x8x32xf32>
    %58 = vector.extract_strided_slice %1 {offsets = [2, 3, 0], sizes = [8, 8, 32], strides = [1, 1, 1]} : vector<11x11x32xf32> to vector<8x8x32xf32>
    %c2_33 = arith.constant 2 : index
    %c3_34 = arith.constant 3 : index
    %c0_35 = arith.constant 0 : index
    %59 = vector.load %arg2[%c2_33, %c3_34, %c0_35] : memref<4x4x32xf32, #tpu.memory_space<vmem>>, vector<1x1x32xf32>
    %60 = vector.broadcast %59 : vector<1x1x32xf32> to vector<8x8x32xf32>
    %61 = arith.mulf %58, %60 : vector<8x8x32xf32>
    %62 = arith.addf %57, %61 : vector<8x8x32xf32>
    %63 = vector.extract_strided_slice %1 {offsets = [3, 0, 0], sizes = [8, 8, 32], strides = [1, 1, 1]} : vector<11x11x32xf32> to vector<8x8x32xf32>
    %c3_36 = arith.constant 3 : index
    %c0_37 = arith.constant 0 : index
    %c0_38 = arith.constant 0 : index
    %64 = vector.load %arg2[%c3_36, %c0_37, %c0_38] : memref<4x4x32xf32, #tpu.memory_space<vmem>>, vector<1x1x32xf32>
    %65 = vector.broadcast %64 : vector<1x1x32xf32> to vector<8x8x32xf32>
    %66 = arith.mulf %63, %65 : vector<8x8x32xf32>
    %67 = arith.addf %62, %66 : vector<8x8x32xf32>
    %68 = vector.extract_strided_slice %1 {offsets = [3, 1, 0], sizes = [8, 8, 32], strides = [1, 1, 1]} : vector<11x11x32xf32> to vector<8x8x32xf32>
    %c3_39 = arith.constant 3 : index
    %c1_40 = arith.constant 1 : index
    %c0_41 = arith.constant 0 : index
    %69 = vector.load %arg2[%c3_39, %c1_40, %c0_41] : memref<4x4x32xf32, #tpu.memory_space<vmem>>, vector<1x1x32xf32>
    %70 = vector.broadcast %69 : vector<1x1x32xf32> to vector<8x8x32xf32>
    %71 = arith.mulf %68, %70 : vector<8x8x32xf32>
    %72 = arith.addf %67, %71 : vector<8x8x32xf32>
    %73 = vector.extract_strided_slice %1 {offsets = [3, 2, 0], sizes = [8, 8, 32], strides = [1, 1, 1]} : vector<11x11x32xf32> to vector<8x8x32xf32>
    %c3_42 = arith.constant 3 : index
    %c2_43 = arith.constant 2 : index
    %c0_44 = arith.constant 0 : index
    %74 = vector.load %arg2[%c3_42, %c2_43, %c0_44] : memref<4x4x32xf32, #tpu.memory_space<vmem>>, vector<1x1x32xf32>
    %75 = vector.broadcast %74 : vector<1x1x32xf32> to vector<8x8x32xf32>
    %76 = arith.mulf %73, %75 : vector<8x8x32xf32>
    %77 = arith.addf %72, %76 : vector<8x8x32xf32>
    %78 = vector.extract_strided_slice %1 {offsets = [3, 3, 0], sizes = [8, 8, 32], strides = [1, 1, 1]} : vector<11x11x32xf32> to vector<8x8x32xf32>
    %c3_45 = arith.constant 3 : index
    %c3_46 = arith.constant 3 : index
    %c0_47 = arith.constant 0 : index
    %79 = vector.load %arg2[%c3_45, %c3_46, %c0_47] : memref<4x4x32xf32, #tpu.memory_space<vmem>>, vector<1x1x32xf32>
    %80 = vector.broadcast %79 : vector<1x1x32xf32> to vector<8x8x32xf32>
    %81 = arith.mulf %78, %80 : vector<8x8x32xf32>
    %82 = arith.addf %77, %81 : vector<8x8x32xf32>
    %c0_48 = arith.constant 0 : index
    %c0_49 = arith.constant 0 : index
    %83 = vector.load %arg3[%c0_48, %c0_49] : memref<1x32xf32, #tpu.memory_space<vmem>>, vector<1x32xf32>
    %84 = vector.shape_cast %83 : vector<1x32xf32> to vector<1x1x32xf32>
    %85 = vector.broadcast %84 : vector<1x1x32xf32> to vector<8x8x32xf32>
    %86 = arith.addf %82, %85 : vector<8x8x32xf32>
    %cst_50 = arith.constant dense<0.000000e+00> : vector<8x8xf32>
    %87 = vector.multi_reduction <add>, %86, %cst_50 [2] : vector<8x8x32xf32> to vector<8x8xf32>
    %88 = vector.shape_cast %87 : vector<8x8xf32> to vector<8x8x1xf32>
    %cst_51 = arith.constant 3.200000e+01 : f32
    %89 = vector.broadcast %cst_51 : f32 to vector<8x8x1xf32>
    %90 = arith.divf %88, %89 : vector<8x8x1xf32>
    %91 = vector.broadcast %90 : vector<8x8x1xf32> to vector<8x8x32xf32>
    %92 = arith.subf %86, %91 : vector<8x8x32xf32>
    %93 = arith.mulf %92, %92 : vector<8x8x32xf32>
    %cst_52 = arith.constant dense<0.000000e+00> : vector<8x8xf32>
    %94 = vector.multi_reduction <add>, %93, %cst_52 [2] : vector<8x8x32xf32> to vector<8x8xf32>
    %95 = vector.shape_cast %94 : vector<8x8xf32> to vector<8x8x1xf32>
    %cst_53 = arith.constant 3.200000e+01 : f32
    %96 = vector.broadcast %cst_53 : f32 to vector<8x8x1xf32>
    %97 = arith.divf %95, %96 : vector<8x8x1xf32>
    %98 = vector.broadcast %90 : vector<8x8x1xf32> to vector<8x8x32xf32>
    %99 = arith.subf %86, %98 : vector<8x8x32xf32>
    %cst_54 = arith.constant 9.99999997E-7 : f32
    %100 = vector.broadcast %cst_54 : f32 to vector<8x8x1xf32>
    %101 = arith.addf %97, %100 : vector<8x8x1xf32>
    %102 = math.rsqrt %101 : vector<8x8x1xf32>
    %103 = vector.broadcast %102 : vector<8x8x1xf32> to vector<8x8x32xf32>
    %104 = arith.mulf %99, %103 : vector<8x8x32xf32>
    %c0_55 = arith.constant 0 : index
    %c0_56 = arith.constant 0 : index
    %105 = vector.load %arg4[%c0_55, %c0_56] : memref<1x32xf32, #tpu.memory_space<vmem>>, vector<1x32xf32>
    %106 = vector.shape_cast %105 : vector<1x32xf32> to vector<1x1x32xf32>
    %107 = vector.broadcast %106 : vector<1x1x32xf32> to vector<8x8x32xf32>
    %108 = arith.mulf %104, %107 : vector<8x8x32xf32>
    %c0_57 = arith.constant 0 : index
    %c0_58 = arith.constant 0 : index
    %109 = vector.load %arg5[%c0_57, %c0_58] : memref<1x32xf32, #tpu.memory_space<vmem>>, vector<1x32xf32>
    %110 = vector.shape_cast %109 : vector<1x32xf32> to vector<1x1x32xf32>
    %111 = vector.broadcast %110 : vector<1x1x32xf32> to vector<8x8x32xf32>
    %112 = arith.addf %108, %111 : vector<8x8x32xf32>
    %cst_59 = arith.constant 5.000000e-01 : f32
    %113 = vector.broadcast %cst_59 : f32 to vector<8x8x32xf32>
    %114 = arith.mulf %113, %112 : vector<8x8x32xf32>
    %cst_60 = arith.constant 0.707106769 : f32
    %115 = vector.broadcast %cst_60 : f32 to vector<8x8x32xf32>
    %116 = arith.mulf %112, %115 : vector<8x8x32xf32>
    %117 = math.absf %116 : vector<8x8x32xf32>
    %cst_61 = arith.constant 0.327591091 : f32
    %118 = vector.broadcast %cst_61 : f32 to vector<8x8x32xf32>
    %119 = arith.mulf %118, %117 : vector<8x8x32xf32>
    %cst_62 = arith.constant 1.000000e+00 : f32
    %120 = vector.broadcast %cst_62 : f32 to vector<8x8x32xf32>
    %121 = arith.addf %120, %119 : vector<8x8x32xf32>
    %cst_63 = arith.constant 1.000000e+00 : f32
    %122 = vector.broadcast %cst_63 : f32 to vector<8x8x32xf32>
    %123 = arith.divf %122, %121 : vector<8x8x32xf32>
    %cst_64 = arith.constant 1.06140542 : f32
    %124 = vector.broadcast %cst_64 : f32 to vector<8x8x32xf32>
    %125 = arith.mulf %124, %123 : vector<8x8x32xf32>
    %cst_65 = arith.constant -1.45315206 : f32
    %126 = vector.broadcast %cst_65 : f32 to vector<8x8x32xf32>
    %127 = arith.addf %125, %126 : vector<8x8x32xf32>
    %128 = arith.mulf %127, %123 : vector<8x8x32xf32>
    %cst_66 = arith.constant 1.42141378 : f32
    %129 = vector.broadcast %cst_66 : f32 to vector<8x8x32xf32>
    %130 = arith.addf %128, %129 : vector<8x8x32xf32>
    %131 = arith.mulf %130, %123 : vector<8x8x32xf32>
    %cst_67 = arith.constant -0.284496725 : f32
    %132 = vector.broadcast %cst_67 : f32 to vector<8x8x32xf32>
    %133 = arith.addf %131, %132 : vector<8x8x32xf32>
    %134 = arith.mulf %133, %123 : vector<8x8x32xf32>
    %cst_68 = arith.constant 0.254829586 : f32
    %135 = vector.broadcast %cst_68 : f32 to vector<8x8x32xf32>
    %136 = arith.addf %134, %135 : vector<8x8x32xf32>
    %137 = arith.mulf %136, %123 : vector<8x8x32xf32>
    %cst_69 = arith.constant 0.000000e+00 : f32
    %138 = vector.broadcast %cst_69 : f32 to vector<8x8x32xf32>
    %139 = arith.subf %138, %117 : vector<8x8x32xf32>
    %140 = arith.mulf %139, %117 : vector<8x8x32xf32>
    %141 = math.exp %140 : vector<8x8x32xf32>
    %142 = arith.mulf %137, %141 : vector<8x8x32xf32>
    %cst_70 = arith.constant 1.000000e+00 : f32
    %143 = vector.broadcast %cst_70 : f32 to vector<8x8x32xf32>
    %144 = arith.subf %143, %142 : vector<8x8x32xf32>
    %cst_71 = arith.constant 0.000000e+00 : f32
    %145 = vector.broadcast %cst_71 : f32 to vector<8x8x32xf32>
    %146 = arith.cmpf olt, %116, %145 : vector<8x8x32xf32>
    %cst_72 = arith.constant 0.000000e+00 : f32
    %147 = vector.broadcast %cst_72 : f32 to vector<8x8x32xf32>
    %148 = arith.subf %147, %144 : vector<8x8x32xf32>
    %149 = arith.select %146, %148, %144 : vector<8x8x32xi1>, vector<8x8x32xf32>
    %cst_73 = arith.constant 1.000000e+00 : f32
    %150 = vector.broadcast %cst_73 : f32 to vector<8x8x32xf32>
    %151 = arith.addf %150, %149 : vector<8x8x32xf32>
    %152 = arith.mulf %114, %151 : vector<8x8x32xf32>
    %c0_74 = arith.constant 0 : index
    %c0_75 = arith.constant 0 : index
    %c0_76 = arith.constant 0 : index
    %c0_77 = arith.constant 0 : index
    %153 = vector.load %arg6[%c0_74, %c0_75, %c0_76, %c0_77] : memref<1x8x8x32xf32, #tpu.memory_space<vmem>>, vector<1x8x8x32xf32>
    %154 = vector.shape_cast %153 : vector<1x8x8x32xf32> to vector<8x8x32xf32>
    %155 = vector.shape_cast %152 : vector<8x8x32xf32> to vector<1x8x8x32xf32>
    tpu.vector_store %arg6[%c0_74, %c0_75, %c0_76, %c0_77], %155 {strides = array<i32>} : memref<1x8x8x32xf32, #tpu.memory_space<vmem>>, vector<1x8x8x32xf32>,
    return
  }
  func.func @transform_0(%arg0: i32) -> (i32, i32, i32, i32) {
    %c0_i32 = arith.constant 0 : i32
    %c0_i32_0 = arith.constant 0 : i32
    %c0_i32_1 = arith.constant 0 : i32
    %c0_i32_2 = arith.constant 0 : i32
    return %arg0, %c0_i32, %c0_i32_0, %c0_i32_1 : i32, i32, i32, i32
  }
  func.func @transform_1(%arg0: i32) -> (i32, i32, i32) {
    %c0_i32 = arith.constant 0 : i32
    %c0_i32_0 = arith.constant 0 : i32
    %c0_i32_1 = arith.constant 0 : i32
    %c0_i32_2 = arith.constant 0 : i32
    return %c0_i32, %c0_i32_0, %c0_i32_1 : i32, i32, i32
  }
  func.func @transform_2(%arg0: i32) -> (i32, i32) {
    %c0_i32 = arith.constant 0 : i32
    %c0_i32_0 = arith.constant 0 : i32
    %c0_i32_1 = arith.constant 0 : i32
    return %c0_i32, %c0_i32_0 : i32, i32
  }
  func.func @transform_3(%arg0: i32) -> (i32, i32) {
    %c0_i32 = arith.constant 0 : i32
    %c0_i32_0 = arith.constant 0 : i32
    %c0_i32_1 = arith.constant 0 : i32
    return %c0_i32, %c0_i32_0 : i32, i32
  }
  func.func @transform_4(%arg0: i32) -> (i32, i32) {
    %c0_i32 = arith.constant 0 : i32
    %c0_i32_0 = arith.constant 0 : i32
    %c0_i32_1 = arith.constant 0 : i32
    return %c0_i32, %c0_i32_0 : i32, i32
  }
  func.func @transform_5(%arg0: i32) -> (i32, i32, i32, i32) {
    %c0_i32 = arith.constant 0 : i32
    %c0_i32_0 = arith.constant 0 : i32
    %c0_i32_1 = arith.constant 0 : i32
    %c0_i32_2 = arith.constant 0 : i32
    return %arg0, %c0_i32, %c0_i32_0, %c0_i32_1 : i32, i32, i32, i32
  }
}

</mosaic_0001>

<llo_original>
// kernel: tpu_custom_call.1
$region0: #{tpu_custom_call.1}
  #allocation0 [shape = 'u32[]', space=smem, size = 0x4, offset = 0x4, fixed_abs, tag = 'smem constant byte address 0x4 - core index']
  #allocation1 [shape = 'u32[144,128]{1,0:T(1,128)}', space=vmem, size = 0x12000, scoped, tag = 'internal scratch']
  %s0 = inlined_call_operand.hbm [shape: f32[2,11,11,32], index: 0, kind: input, shape index: {}]
  %s1 = inlined_call_operand.hbm [shape: f32[4,4,32], index: 1, kind: input, shape index: {}]
  %s2 = inlined_call_operand.hbm [shape: f32[1,32], index: 2, kind: input, shape index: {}]
  %s3 = inlined_call_operand.hbm [shape: f32[1,32], index: 3, kind: input, shape index: {}]
  %s4 = inlined_call_operand.hbm [shape: f32[1,32], index: 4, kind: input, shape index: {}]
  %s5 = inlined_call_operand.hbm [shape: f32[2,8,8,32], index: 5, kind: output, shape index: {}]
  %s6 = sld [smem:[#allocation0]]
  $region73: #{tpu_custom_call.1} parent=0
    _
  %s8 = ssub.s32 1, %s6
  %s9 = scalar_select 0, %s8, %s6
  $region1: #{tpu_custom_call.1} parent=0
    #allocation2 [shape = 'u8[180224]{0}', space=vmem, size = 0x2c000, scoped, tag = 'input window, operand 0']
    #allocation3 [shape = 's32[2]{0}', space=sflag, size = 0x8, scoped, tag = 'scoped memory for tpu_custom_call.1']
    #allocation4 [shape = 's32[2]{0}', space=sflag, size = 0x8, scoped, tag = 'scoped memory for tpu_custom_call.1']
    #allocation5 [shape = 'u8[8192]{0}', space=vmem, size = 0x2000, scoped, tag = 'input window, operand 1, single buffered']
    #allocation6 [shape = 's32[1]{0}', space=sflag, size = 0x4, scoped, tag = 'scoped memory for tpu_custom_call.1']
    #allocation7 [shape = 'u8[512]{0}', space=vmem, size = 0x400, scoped, tag = 'input window, operand 2, single buffered']
    #allocation8 [shape = 'u8[512]{0}', space=vmem, size = 0x400, scoped, tag = 'input window, operand 3, single buffered']
    #allocation9 [shape = 's32[1]{0}', space=sflag, size = 0x4, scoped, tag = 'scoped memory for tpu_custom_call.1']
    #allocation10 [shape = 'u8[512]{0}', space=vmem, size = 0x400, scoped, tag = 'input window, operand 4, single buffered']
    #allocation11 [shape = 'u8[65536]{0}', space=vmem, size = 0x10000, scoped, tag = 'output window, operand 0']
    %10 = vsyncpa [#allocation3], 0
    %s11 = scalar_lea.sflag [#allocation3], 1
    %12 = vsyncpa %s11, 0
    %13 = vsyncpa [#allocation6], 0
    %14 = vsyncpa [#allocation9], 0
    %15 = vsyncpa [#allocation4], 0
    %s16 = scalar_lea.sflag [#allocation4], 1
    %17 = vsyncpa %s16, 0
    loop: start=0, step=1, limit=4
    $region2: #{tpu_custom_call.1} parent=1 // loop_pre_header
      _
    $region3: #{tpu_custom_call.1} parent=1 // loop_header
      %s19 = sphi 0, %s23
      %p20 = scmp.ge.s32.totalorder %s19, 4
      %s29 = sphi 0, %s31
      %s32 = sphi 0, %s29
      %s33 = sphi 0, %s32
      %s49 = sphi 0, %s33
      %s53 = sphi 0, %s53
      %s55 = sphi 0, %s53
      %s56 = sphi 0, %s55
      %s70 = sphi 0, %s56
      %s74 = sphi 0, %s74
      %s76 = sphi 0, %s74
      %s77 = sphi 0, %s76
      %s91 = sphi 0, %s77
      %s95 = sphi 0, %s95
      %s97 = sphi 0, %s95
      %s98 = sphi 0, %s97
      %s112 = sphi 0, %s98
      %s116 = sphi 0, %s116
      %s118 = sphi 0, %s116
      %s119 = sphi 0, %s118
      %s133 = sphi 0, %s119
      %s139 = sphi 0, %s141
      %s142 = sphi 0, %s139
      %s143 = sphi 0, %s142
      %s159 = sphi 0, %s143
    $region4: #{tpu_custom_call.1} parent=1 // loop_header_branch
      %22 = sbr.rel (%p20) target = $region8
    $region5: #{tpu_custom_call.1} parent=1 // loop_body
      %s24 = ssub.s32 %s19, 1
      %s25 = ssub.s32 %s19, 2
      %s26 = sadd.s32 %s19, 1
      %s27 = ssub.s32 %s19, %s26
      %p28 = scmp.eq.s32.totalorder %s27, 0
      %s30 = sadd.s32 %s29, 1
      %s31 = scalar_select %p28, %s29, %s30
      %p34 = pneg %p28
      %p35 = scmp.eq.s32.totalorder %s19, 1
      %p36 = por %p34, %p35
      %p37 = scmp.ne.s32.totalorder %s29, %s32
      %p38 = scmp.eq.s32.totalorder %s19, 0
      %p39 = por %p37, %p38
      %p40 = scmp.ne.s32.totalorder %s29, %s32
      %p41 = scmp.eq.s32.totalorder %s24, 1
      %p42 = por %p40, %p41
      %p43 = scmp.ne.s32.totalorder %s32, %s33
      %p44 = scmp.eq.s32.totalorder %s24, 0
      %p45 = por %p43, %p44
      %p46 = scmp.ne.s32.totalorder %s32, %s33
      %p47 = scmp.eq.s32.totalorder %s25, 1
      %p48 = por %p46, %p47
      %p50 = scmp.ne.s32.totalorder %s33, %s49
      %p51 = scmp.eq.s32.totalorder %s25, 0
      %p52 = por %p50, %p51
      %s54 = sadd.s32 %s53, 1
      %p57 = scmp.eq.s32.totalorder %s19, 1
      %p58 = scmp.ne.s32.totalorder %s53, %s55
      %p59 = scmp.eq.s32.totalorder %s19, 0
      %p60 = por %p58, %p59
      %p61 = scmp.ne.s32.totalorder %s53, %s55
      %p62 = scmp.eq.s32.totalorder %s24, 1
      %p63 = por %p61, %p62
      %p64 = scmp.ne.s32.totalorder %s55, %s56
      %p65 = scmp.eq.s32.totalorder %s24, 0
      %p66 = por %p64, %p65
      %p67 = scmp.ne.s32.totalorder %s55, %s56
      %p68 = scmp.eq.s32.totalorder %s25, 1
      %p69 = por %p67, %p68
      %p71 = scmp.ne.s32.totalorder %s56, %s70
      %p72 = scmp.eq.s32.totalorder %s25, 0
      %p73 = por %p71, %p72
      %s75 = sadd.s32 %s74, 1
      %p78 = scmp.eq.s32.totalorder %s19, 1
      %p79 = scmp.ne.s32.totalorder %s74, %s76
      %p80 = scmp.eq.s32.totalorder %s19, 0
      %p81 = por %p79, %p80
      %p82 = scmp.ne.s32.totalorder %s74, %s76
      %p83 = scmp.eq.s32.totalorder %s24, 1
      %p84 = por %p82, %p83
      %p85 = scmp.ne.s32.totalorder %s76, %s77
      %p86 = scmp.eq.s32.totalorder %s24, 0
      %p87 = por %p85, %p86
      %p88 = scmp.ne.s32.totalorder %s76, %s77
      %p89 = scmp.eq.s32.totalorder %s25, 1
      %p90 = por %p88, %p89
      %p92 = scmp.ne.s32.totalorder %s77, %s91
      %p93 = scmp.eq.s32.totalorder %s25, 0
      %p94 = por %p92, %p93
      %s96 = sadd.s32 %s95, 1
      %p99 = scmp.eq.s32.totalorder %s19, 1
      %p100 = scmp.ne.s32.totalorder %s95, %s97
      %p101 = scmp.eq.s32.totalorder %s19, 0
      %p102 = por %p100, %p101
      %p103 = scmp.ne.s32.totalorder %s95, %s97
      %p104 = scmp.eq.s32.totalorder %s24, 1
      %p105 = por %p103, %p104
      %p106 = scmp.ne.s32.totalorder %s97, %s98
      %p107 = scmp.eq.s32.totalorder %s24, 0
      %p108 = por %p106, %p107
      %p109 = scmp.ne.s32.totalorder %s97, %s98
      %p110 = scmp.eq.s32.totalorder %s25, 1
      %p111 = por %p109, %p110
      %p113 = scmp.ne.s32.totalorder %s98, %s112
      %p114 = scmp.eq.s32.totalorder %s25, 0
      %p115 = por %p113, %p114
      %s117 = sadd.s32 %s116, 1
      %p120 = scmp.eq.s32.totalorder %s19, 1
      %p121 = scmp.ne.s32.totalorder %s116, %s118
      %p122 = scmp.eq.s32.totalorder %s19, 0
      %p123 = por %p121, %p122
      %p124 = scmp.ne.s32.totalorder %s116, %s118
      %p125 = scmp.eq.s32.totalorder %s24, 1
      %p126 = por %p124, %p125
      %p127 = scmp.ne.s32.totalorder %s118, %s119
      %p128 = scmp.eq.s32.totalorder %s24, 0
      %p129 = por %p127, %p128
      %p130 = scmp.ne.s32.totalorder %s118, %s119
      %p131 = scmp.eq.s32.totalorder %s25, 1
      %p132 = por %p130, %p131
      %p134 = scmp.ne.s32.totalorder %s119, %s133
      %p135 = scmp.eq.s32.totalorder %s25, 0
      %p136 = por %p134, %p135
      %s137 = ssub.s32 %s19, %s26
      %p138 = scmp.eq.s32.totalorder %s137, 0
      %s140 = sadd.s32 %s139, 1
      %s141 = scalar_select %p138, %s139, %s140
      %p144 = pneg %p138
      %p145 = scmp.eq.s32.totalorder %s19, 1
      %p146 = por %p144, %p145
      %p147 = scmp.ne.s32.totalorder %s139, %s142
      %p148 = scmp.eq.s32.totalorder %s19, 0
      %p149 = por %p147, %p148
      %p150 = scmp.ne.s32.totalorder %s139, %s142
      %p151 = scmp.eq.s32.totalorder %s24, 1
      %p152 = por %p150, %p151
      %p153 = scmp.ne.s32.totalorder %s142, %s143
      %p154 = scmp.eq.s32.totalorder %s24, 0
      %p155 = por %p153, %p154
      %p156 = scmp.ne.s32.totalorder %s142, %s143
      %p157 = scmp.eq.s32.totalorder %s25, 1
      %p158 = por %p156, %p157
      %p160 = scmp.ne.s32.totalorder %s143, %s159
      %p161 = scmp.eq.s32.totalorder %s25, 0
      %p162 = por %p160, %p161
      %p163 = scmp.le.s32.totalorder 1, %s19
      %p164 = scmp.lt.s32.totalorder %s19, 3
      %p165 = pnand %p163, %p164
      %p166 = pneg %p165
      // Predicated region
      $region9: #{tpu_custom_call.1} parent=5 // pred_check
        _
      $region10: #{tpu_custom_call.1} parent=5 // pred_check_branch
        %168 = sbr.rel (%p165) target = $region12
      $region11: #{tpu_custom_call.1} parent=5 // pred_region
        %s169 = ssub.s32 %s19, 1
        // Predicated region
        $region13: #{tpu_custom_call.1} parent=11 // pred_check
          %p170 = pneg %p66
        $region14: #{tpu_custom_call.1} parent=11 // pred_check_branch
          %172 = sbr.rel (%p170) target = $region16
        $region15: #{tpu_custom_call.1} parent=11 // pred_region
          %s174 = ssub.s32 256, 256
          %175 = vsyncadd [#allocation6], %s174
          %s176 = sshll.u32 [#allocation5], 4
          %s177 = int_to_ptr.vmem [resolvable:$true] %s176
          %182 = dma.hbm_to_vmem [thread:$0]  %s1, 256, %s177, [#allocation6], 64, 64, 4
        $region16: #{tpu_custom_call.1} parent=11 // pred_fallthru
          _
        // Predicated region
        $region17: #{tpu_custom_call.1} parent=11 // pred_check
          %p183 = pneg %p87
        $region18: #{tpu_custom_call.1} parent=11 // pred_check_branch
          %185 = sbr.rel (%p183) target = $region20
        $region19: #{tpu_custom_call.1} parent=11 // pred_region
          %s187 = ssub.s32 16, 16
          %188 = vsyncadd [#allocation6], %s187
          %s190 = sshll.u32 [#allocation7], 4
          %s191 = int_to_ptr.vmem [resolvable:$true] %s190
          %193 = dma.hbm_to_vmem [thread:$0]  %s2, 16, %s191, [#allocation6]
        $region20: #{tpu_custom_call.1} parent=11 // pred_fallthru
          _
        // Predicated region
        $region21: #{tpu_custom_call.1} parent=11 // pred_check
          %p194 = pneg %p108
        $region22: #{tpu_custom_call.1} parent=11 // pred_check_branch
          %196 = sbr.rel (%p194) target = $region24
        $region23: #{tpu_custom_call.1} parent=11 // pred_region
          %s198 = ssub.s32 16, 16
          %199 = vsyncadd [#allocation9], %s198
          %s201 = sshll.u32 [#allocation8], 4
          %s202 = int_to_ptr.vmem [resolvable:$true] %s201
          %204 = dma.hbm_to_vmem [thread:$0]  %s3, 16, %s202, [#allocation9]
        $region24: #{tpu_custom_call.1} parent=11 // pred_fallthru
          _
        // Predicated region
        $region25: #{tpu_custom_call.1} parent=11 // pred_check
          %p205 = pneg %p129
        $region26: #{tpu_custom_call.1} parent=11 // pred_check_branch
          %207 = sbr.rel (%p205) target = $region28
        $region27: #{tpu_custom_call.1} parent=11 // pred_region
          %s209 = ssub.s32 16, 16
          %210 = vsyncadd [#allocation9], %s209
          %s212 = sshll.u32 [#allocation10], 4
          %s213 = int_to_ptr.vmem [resolvable:$true] %s212
          %215 = dma.hbm_to_vmem [thread:$0]  %s4, 16, %s213, [#allocation9]
        $region28: #{tpu_custom_call.1} parent=11 // pred_fallthru
          _
      $region12: #{tpu_custom_call.1} parent=5 // pred_fallthru
        _
      %p216 = scmp.lt.s32.totalorder %s19, 2
      // Predicated region
      $region29: #{tpu_custom_call.1} parent=5 // pred_check
        %p217 = pneg %p216
      $region30: #{tpu_custom_call.1} parent=5 // pred_check_branch
        %219 = sbr.rel (%p217) target = $region32
      $region31: #{tpu_custom_call.1} parent=5 // pred_region
        // Predicated region
        $region33: #{tpu_custom_call.1} parent=31 // pred_check
          %p220 = pneg %p39
        $region34: #{tpu_custom_call.1} parent=31 // pred_check_branch
          %222 = sbr.rel (%p220) target = $region36
        $region35: #{tpu_custom_call.1} parent=31 // pred_region
          %s223 = sand.u32 %s29, 1
          %s224 = scalar_lea.sflag [#allocation3], %s223
          %s225 = sand.u32 %s29, 1
          %s226 = smul.addr %s225, 176
          %s227 = scalar_lea.vmem [#allocation2], %s226
          %s229 = ssub.s32 2816, 2816
          %230 = vsyncadd %s224, %s229
          %s231 = smul.addr %s19, 22
          %s232 = smul.addr %s231, 128
          %s233 = scalar_lea.hbm %s0, %s232
          %s234 = sshll.u32 %s227, 4
          %s235 = int_to_ptr.vmem [resolvable:$true] %s234
          %240 = dma.hbm_to_vmem [thread:$0]  %s233, 2816, %s235, %s224, 128, 128, 8
        $region36: #{tpu_custom_call.1} parent=31 // pred_fallthru
          _
      $region32: #{tpu_custom_call.1} parent=5 // pred_fallthru
        _
      %p241 = scmp.le.s32.totalorder 1, %s19
      %p242 = scmp.lt.s32.totalorder %s19, 3
      %p243 = pnand %p241, %p242
      %p244 = pneg %p243
      // Predicated region
      $region37: #{tpu_custom_call.1} parent=5 // pred_check
        _
      $region38: #{tpu_custom_call.1} parent=5 // pred_check_branch
        %246 = sbr.rel (%p243) target = $region40
      $region39: #{tpu_custom_call.1} parent=5 // pred_region
        %s247 = ssub.s32 %s19, 1
        %s248 = sand.u32 %s32, 1
        %s249 = scalar_lea.sflag [#allocation3], %s248
        %s250 = sand.u32 %s32, 1
        %s251 = smul.addr %s250, 176
        %s252 = scalar_lea.vmem [#allocation2], %s251
        // Predicated region
        $region41: #{tpu_custom_call.1} parent=39 // pred_check
          %p253 = pneg %p45
        $region42: #{tpu_custom_call.1} parent=39 // pred_check_branch
          %255 = sbr.rel (%p253) target = $region44
        $region43: #{tpu_custom_call.1} parent=39 // pred_region
          %256 = dma.done %s249, 2816
        $region44: #{tpu_custom_call.1} parent=39 // pred_fallthru
          _
        // Predicated region
        $region45: #{tpu_custom_call.1} parent=39 // pred_check
          %p257 = pneg %p66
        $region46: #{tpu_custom_call.1} parent=39 // pred_check_branch
          %259 = sbr.rel (%p257) target = $region48
        $region47: #{tpu_custom_call.1} parent=39 // pred_region
          %260 = dma.done [#allocation6], 256
        $region48: #{tpu_custom_call.1} parent=39 // pred_fallthru
          _
        // Predicated region
        $region49: #{tpu_custom_call.1} parent=39 // pred_check
          %p261 = pneg %p87
        $region50: #{tpu_custom_call.1} parent=39 // pred_check_branch
          %263 = sbr.rel (%p261) target = $region52
        $region51: #{tpu_custom_call.1} parent=39 // pred_region
          %264 = dma.done [#allocation6], 16
        $region52: #{tpu_custom_call.1} parent=39 // pred_fallthru
          _
        // Predicated region
        $region53: #{tpu_custom_call.1} parent=39 // pred_check
          %p265 = pneg %p108
        $region54: #{tpu_custom_call.1} parent=39 // pred_check_branch
          %267 = sbr.rel (%p265) target = $region56
        $region55: #{tpu_custom_call.1} parent=39 // pred_region
          %268 = dma.done [#allocation9], 16
        $region56: #{tpu_custom_call.1} parent=39 // pred_fallthru
          _
        // Predicated region
        $region57: #{tpu_custom_call.1} parent=39 // pred_check
          %p269 = pneg %p129
        $region58: #{tpu_custom_call.1} parent=39 // pred_check_branch
          %271 = sbr.rel (%p269) target = $region60
        $region59: #{tpu_custom_call.1} parent=39 // pred_region
          %272 = dma.done [#allocation9], 16
        $region60: #{tpu_custom_call.1} parent=39 // pred_fallthru
          _
        %s273 = sand.u32 %s32, 1
        %s274 = scalar_lea.sflag [#allocation3], %s273
        %s275 = sand.u32 %s32, 1
        %s276 = smul.addr %s275, 176
        %s277 = scalar_lea.vmem [#allocation2], %s276
        %p278 = pneg %p45
        %p279 = pneg %p42
        %p280 = pneg %p66
        %p281 = pneg %p63
        %p282 = pneg %p87
        %p283 = pneg %p84
        %p284 = pneg %p108
        %p285 = pneg %p105
        %p286 = pneg %p129
        %p287 = pneg %p126
        %p288 = pneg %p155
        %p289 = pneg %p152
        %s290 = sand.u32 %s142, 1
        %s291 = scalar_lea.sflag [#allocation4], %s290
        %s292 = sand.u32 %s142, 1
        %s293 = smul.addr %s292, 64
        %s294 = scalar_lea.vmem [#allocation11], %s293
        %v295 = vld [vmem:[%s252] sm:$0xff]
        %v296 = vld [vmem:[%s252 + $0x8] sm:$0x7]
        %v297 = vld [vmem:[%s252 + $0x10] sm:$0xff]
        %v298 = vld [vmem:[%s252 + $0x18] sm:$0x7]
        %v299 = vld [vmem:[%s252 + $0x20] sm:$0xff]
        %v300 = vld [vmem:[%s252 + $0x28] sm:$0x7]
        %v301 = vld [vmem:[%s252 + $0x30] sm:$0xff]
        %v302 = vld [vmem:[%s252 + $0x38] sm:$0x7]
        %v303 = vld [vmem:[%s252 + $0x40] sm:$0xff]
        %v304 = vld [vmem:[%s252 + $0x48] sm:$0x7]
        %v305 = vld [vmem:[%s252 + $0x50] sm:$0xff]
        %v306 = vld [vmem:[%s252 + $0x58] sm:$0x7]
        %v307 = vld [vmem:[%s252 + $0x60] sm:$0xff]
        %v308 = vld [vmem:[%s252 + $0x68] sm:$0x7]
        %v309 = vld [vmem:[%s252 + $0x70] sm:$0xff]
        %v310 = vld [vmem:[%s252 + $0x78] sm:$0x7]
        %v311 = vld [vmem:[%s252 + $0x80] sm:$0xff]
        %v312 = vld [vmem:[%s252 + $0x88] sm:$0x7]
        %v313 = vld [vmem:[%s252 + $0x90] sm:$0xff]
        %v314 = vld [vmem:[%s252 + $0x98] sm:$0x7]
        %v315 = vld [vmem:[%s252 + $0xa0] sm:$0xff]
        %v316 = vld [vmem:[%s252 + $0xa8] sm:$0x7]
        %v317 = vld [vmem:[#allocation5] sm:$0x1]
        %v318 = vlaneseq
        %v319 = vshrl.u32 %v318, 7
        %v320 = vsub.s32 0, %v319
        %v321 = vrot.slane %v317, %v320
        %v322 = vmul.f32 %v295, %v321
        %v323 = vmul.f32 %v297, %v321
        %v324 = vmul.f32 %v299, %v321
        %v325 = vmul.f32 %v301, %v321
        %v326 = vmul.f32 %v303, %v321
        %v327 = vmul.f32 %v305, %v321
        %v328 = vmul.f32 %v307, %v321
        %v329 = vmul.f32 %v309, %v321
        %v330 = vadd.f32 %v322, 0.0
        %v331 = vadd.f32 %v323, 0.0
        %v332 = vadd.f32 %v324, 0.0
        %v333 = vadd.f32 %v325, 0.0
        %v334 = vadd.f32 %v326, 0.0
        %v335 = vadd.f32 %v327, 0.0
        %v336 = vadd.f32 %v328, 0.0
        %v337 = vadd.f32 %v329, 0.0
        %v338 = vld [vmem:[#allocation5 + $0x1] sm:$0x1]
        %v339 = vlaneseq
        %v340 = vshrl.u32 %v339, 7
        %v341 = vsub.s32 0, %v340
        %v342 = vrot.slane %v338, %v341
        %v343 = vmul.f32 %v295, %v342
        %v344 = vmul.f32 %v296, %v342
        %v345 = vmul.f32 %v297, %v342
        %v346 = vmul.f32 %v298, %v342
        %v347 = vmul.f32 %v299, %v342
        %v348 = vmul.f32 %v300, %v342
        %v349 = vmul.f32 %v301, %v342
        %v350 = vmul.f32 %v302, %v342
        %v351 = vmul.f32 %v303, %v342
        %v352 = vmul.f32 %v304, %v342
        %v353 = vmul.f32 %v305, %v342
        %v354 = vmul.f32 %v306, %v342
        %v355 = vmul.f32 %v307, %v342
        %v356 = vmul.f32 %v308, %v342
        %v357 = vmul.f32 %v309, %v342
        %v358 = vmul.f32 %v310, %v342
        %vm375 = vcmask 1046528
        %v376 = vrot.slane %v343, 1
        %v377 = vrot.slane %v344, 1
        %v378 = vsel %vm375, %v376, %v377
        %v379 = vrot.slane %v345, 1
        %v380 = vrot.slane %v346, 1
        %v381 = vsel %vm375, %v379, %v380
        %v382 = vrot.slane %v347, 1
        %v383 = vrot.slane %v348, 1
        %v384 = vsel %vm375, %v382, %v383
        %v385 = vrot.slane %v349, 1
        %v386 = vrot.slane %v350, 1
        %v387 = vsel %vm375, %v385, %v386
        %v388 = vrot.slane %v351, 1
        %v389 = vrot.slane %v352, 1
        %v390 = vsel %vm375, %v388, %v389
        %v391 = vrot.slane %v353, 1
        %v392 = vrot.slane %v354, 1
        %v393 = vsel %vm375, %v391, %v392
        %v394 = vrot.slane %v355, 1
        %v395 = vrot.slane %v356, 1
        %v396 = vsel %vm375, %v394, %v395
        %v397 = vrot.slane %v357, 1
        %v398 = vrot.slane %v358, 1
        %v399 = vsel %vm375, %v397, %v398
        %v408 = vadd.f32 %v330, %v378
        %v409 = vadd.f32 %v331, %v381
        %v410 = vadd.f32 %v332, %v384
        %v411 = vadd.f32 %v333, %v387
        %v412 = vadd.f32 %v334, %v390
        %v413 = vadd.f32 %v335, %v393
        %v414 = vadd.f32 %v336, %v396
        %v415 = vadd.f32 %v337, %v399
        %v416 = vld [vmem:[#allocation5 + $0x2] sm:$0x1]
        %v417 = vlaneseq
        %v418 = vshrl.u32 %v417, 7
        %v419 = vsub.s32 0, %v418
        %v420 = vrot.slane %v416, %v419
        %v421 = vmul.f32 %v295, %v420
        %v422 = vmul.f32 %v296, %v420
        %v423 = vmul.f32 %v297, %v420
        %v424 = vmul.f32 %v298, %v420
        %v425 = vmul.f32 %v299, %v420
        %v426 = vmul.f32 %v300, %v420
        %v427 = vmul.f32 %v301, %v420
        %v428 = vmul.f32 %v302, %v420
        %v429 = vmul.f32 %v303, %v420
        %v430 = vmul.f32 %v304, %v420
        %v431 = vmul.f32 %v305, %v420
        %v432 = vmul.f32 %v306, %v420
        %v433 = vmul.f32 %v307, %v420
        %v434 = vmul.f32 %v308, %v420
        %v435 = vmul.f32 %v309, %v420
        %v436 = vmul.f32 %v310, %v420
        %vm453 = vcmask 1045504
        %v454 = vrot.slane %v421, 2
        %v455 = vrot.slane %v422, 2
        %v456 = vsel %vm453, %v454, %v455
        %v457 = vrot.slane %v423, 2
        %v458 = vrot.slane %v424, 2
        %v459 = vsel %vm453, %v457, %v458
        %v460 = vrot.slane %v425, 2
        %v461 = vrot.slane %v426, 2
        %v462 = vsel %vm453, %v460, %v461
        %v463 = vrot.slane %v427, 2
        %v464 = vrot.slane %v428, 2
        %v465 = vsel %vm453, %v463, %v464
        %v466 = vrot.slane %v429, 2
        %v467 = vrot.slane %v430, 2
        %v468 = vsel %vm453, %v466, %v467
        %v469 = vrot.slane %v431, 2
        %v470 = vrot.slane %v432, 2
        %v471 = vsel %vm453, %v469, %v470
        %v472 = vrot.slane %v433, 2
        %v473 = vrot.slane %v434, 2
        %v474 = vsel %vm453, %v472, %v473
        %v475 = vrot.slane %v435, 2
        %v476 = vrot.slane %v436, 2
        %v477 = vsel %vm453, %v475, %v476
        %v486 = vadd.f32 %v408, %v456
        %v487 = vadd.f32 %v409, %v459
        %v488 = vadd.f32 %v410, %v462
        %v489 = vadd.f32 %v411, %v465
        %v490 = vadd.f32 %v412, %v468
        %v491 = vadd.f32 %v413, %v471
        %v492 = vadd.f32 %v414, %v474
        %v493 = vadd.f32 %v415, %v477
        %v494 = vld [vmem:[#allocation5 + $0x3] sm:$0x1]
        %v495 = vlaneseq
        %v496 = vshrl.u32 %v495, 7
        %v497 = vsub.s32 0, %v496
        %v498 = vrot.slane %v494, %v497
        %v499 = vmul.f32 %v295, %v498
        %v500 = vmul.f32 %v296, %v498
        %v501 = vmul.f32 %v297, %v498
        %v502 = vmul.f32 %v298, %v498
        %v503 = vmul.f32 %v299, %v498
        %v504 = vmul.f32 %v300, %v498
        %v505 = vmul.f32 %v301, %v498
        %v506 = vmul.f32 %v302, %v498
        %v507 = vmul.f32 %v303, %v498
        %v508 = vmul.f32 %v304, %v498
        %v509 = vmul.f32 %v305, %v498
        %v510 = vmul.f32 %v306, %v498
        %v511 = vmul.f32 %v307, %v498
        %v512 = vmul.f32 %v308, %v498
        %v513 = vmul.f32 %v309, %v498
        %v514 = vmul.f32 %v310, %v498
        %vm531 = vcmask 1044480
        %v532 = vrot.slane %v499, 3
        %v533 = vrot.slane %v500, 3
        %v534 = vsel %vm531, %v532, %v533
        %v535 = vrot.slane %v501, 3
        %v536 = vrot.slane %v502, 3
        %v537 = vsel %vm531, %v535, %v536
        %v538 = vrot.slane %v503, 3
        %v539 = vrot.slane %v504, 3
        %v540 = vsel %vm531, %v538, %v539
        %v541 = vrot.slane %v505, 3
        %v542 = vrot.slane %v506, 3
        %v543 = vsel %vm531, %v541, %v542
        %v544 = vrot.slane %v507, 3
        %v545 = vrot.slane %v508, 3
        %v546 = vsel %vm531, %v544, %v545
        %v547 = vrot.slane %v509, 3
        %v548 = vrot.slane %v510, 3
        %v549 = vsel %vm531, %v547, %v548
        %v550 = vrot.slane %v511, 3
        %v551 = vrot.slane %v512, 3
        %v552 = vsel %vm531, %v550, %v551
        %v553 = vrot.slane %v513, 3
        %v554 = vrot.slane %v514, 3
        %v555 = vsel %vm531, %v553, %v554
        %v564 = vadd.f32 %v486, %v534
        %v565 = vadd.f32 %v487, %v537
        %v566 = vadd.f32 %v488, %v540
        %v567 = vadd.f32 %v489, %v543
        %v568 = vadd.f32 %v490, %v546
        %v569 = vadd.f32 %v491, %v549
        %v570 = vadd.f32 %v492, %v552
        %v571 = vadd.f32 %v493, %v555
        %s572 = scalar_lea.vmem [#allocation5], 4
        %v573 = vld [vmem:[%s572] sm:$0x1]
        %v574 = vlaneseq
        %v575 = vshrl.u32 %v574, 7
        %v576 = vsub.s32 0, %v575
        %v577 = vrot.slane %v573, %v576
        %v578 = vmul.f32 %v297, %v577
        %v579 = vmul.f32 %v299, %v577
        %v580 = vmul.f32 %v301, %v577
        %v581 = vmul.f32 %v303, %v577
        %v582 = vmul.f32 %v305, %v577
        %v583 = vmul.f32 %v307, %v577
        %v584 = vmul.f32 %v309, %v577
        %v585 = vmul.f32 %v311, %v577
        %v586 = vadd.f32 %v564, %v578
        %v587 = vadd.f32 %v565, %v579
        %v588 = vadd.f32 %v566, %v580
        %v589 = vadd.f32 %v567, %v581
        %v590 = vadd.f32 %v568, %v582
        %v591 = vadd.f32 %v569, %v583
        %v592 = vadd.f32 %v570, %v584
        %v593 = vadd.f32 %v571, %v585
        %v594 = vld [vmem:[%s572 + $0x1] sm:$0x1]
        %v595 = vlaneseq
        %v596 = vshrl.u32 %v595, 7
        %v597 = vsub.s32 0, %v596
        %v598 = vrot.slane %v594, %v597
        %v599 = vmul.f32 %v297, %v598
        %v600 = vmul.f32 %v298, %v598
        %v601 = vmul.f32 %v299, %v598
        %v602 = vmul.f32 %v300, %v598
        %v603 = vmul.f32 %v301, %v598
        %v604 = vmul.f32 %v302, %v598
        %v605 = vmul.f32 %v303, %v598
        %v606 = vmul.f32 %v304, %v598
        %v607 = vmul.f32 %v305, %v598
        %v608 = vmul.f32 %v306, %v598
        %v609 = vmul.f32 %v307, %v598
        %v610 = vmul.f32 %v308, %v598
        %v611 = vmul.f32 %v309, %v598
        %v612 = vmul.f32 %v310, %v598
        %v613 = vmul.f32 %v311, %v598
        %v614 = vmul.f32 %v312, %v598
        %v631 = vrot.slane %v599, 1
        %v632 = vrot.slane %v600, 1
        %v633 = vsel %vm375, %v631, %v632
        %v634 = vrot.slane %v601, 1
        %v635 = vrot.slane %v602, 1
        %v636 = vsel %vm375, %v634, %v635
        %v637 = vrot.slane %v603, 1
        %v638 = vrot.slane %v604, 1
        %v639 = vsel %vm375, %v637, %v638
        %v640 = vrot.slane %v605, 1
        %v641 = vrot.slane %v606, 1
        %v642 = vsel %vm375, %v640, %v641
        %v643 = vrot.slane %v607, 1
        %v644 = vrot.slane %v608, 1
        %v645 = vsel %vm375, %v643, %v644
        %v646 = vrot.slane %v609, 1
        %v647 = vrot.slane %v610, 1
        %v648 = vsel %vm375, %v646, %v647
        %v649 = vrot.slane %v611, 1
        %v650 = vrot.slane %v612, 1
        %v651 = vsel %vm375, %v649, %v650
        %v652 = vrot.slane %v613, 1
        %v653 = vrot.slane %v614, 1
        %v654 = vsel %vm375, %v652, %v653
        %v663 = vadd.f32 %v586, %v633
        %v664 = vadd.f32 %v587, %v636
        %v665 = vadd.f32 %v588, %v639
        %v666 = vadd.f32 %v589, %v642
        %v667 = vadd.f32 %v590, %v645
        %v668 = vadd.f32 %v591, %v648
        %v669 = vadd.f32 %v592, %v651
        %v670 = vadd.f32 %v593, %v654
        %v671 = vld [vmem:[%s572 + $0x2] sm:$0x1]
        %v672 = vlaneseq
        %v673 = vshrl.u32 %v672, 7
        %v674 = vsub.s32 0, %v673
        %v675 = vrot.slane %v671, %v674
        %v676 = vmul.f32 %v297, %v675
        %v677 = vmul.f32 %v298, %v675
        %v678 = vmul.f32 %v299, %v675
        %v679 = vmul.f32 %v300, %v675
        %v680 = vmul.f32 %v301, %v675
        %v681 = vmul.f32 %v302, %v675
        %v682 = vmul.f32 %v303, %v675
        %v683 = vmul.f32 %v304, %v675
        %v684 = vmul.f32 %v305, %v675
        %v685 = vmul.f32 %v306, %v675
        %v686 = vmul.f32 %v307, %v675
        %v687 = vmul.f32 %v308, %v675
        %v688 = vmul.f32 %v309, %v675
        %v689 = vmul.f32 %v310, %v675
        %v690 = vmul.f32 %v311, %v675
        %v691 = vmul.f32 %v312, %v675
        %v708 = vrot.slane %v676, 2
        %v709 = vrot.slane %v677, 2
        %v710 = vsel %vm453, %v708, %v709
        %v711 = vrot.slane %v678, 2
        %v712 = vrot.slane %v679, 2
        %v713 = vsel %vm453, %v711, %v712
        %v714 = vrot.slane %v680, 2
        %v715 = vrot.slane %v681, 2
        %v716 = vsel %vm453, %v714, %v715
        %v717 = vrot.slane %v682, 2
        %v718 = vrot.slane %v683, 2
        %v719 = vsel %vm453, %v717, %v718
        %v720 = vrot.slane %v684, 2
        %v721 = vrot.slane %v685, 2
        %v722 = vsel %vm453, %v720, %v721
        %v723 = vrot.slane %v686, 2
        %v724 = vrot.slane %v687, 2
        %v725 = vsel %vm453, %v723, %v724
        %v726 = vrot.slane %v688, 2
        %v727 = vrot.slane %v689, 2
        %v728 = vsel %vm453, %v726, %v727
        %v729 = vrot.slane %v690, 2
        %v730 = vrot.slane %v691, 2
        %v731 = vsel %vm453, %v729, %v730
        %v740 = vadd.f32 %v663, %v710
        %v741 = vadd.f32 %v664, %v713
        %v742 = vadd.f32 %v665, %v716
        %v743 = vadd.f32 %v666, %v719
        %v744 = vadd.f32 %v667, %v722
        %v745 = vadd.f32 %v668, %v725
        %v746 = vadd.f32 %v669, %v728
        %v747 = vadd.f32 %v670, %v731
        %v748 = vld [vmem:[%s572 + $0x3] sm:$0x1]
        %v749 = vlaneseq
        %v750 = vshrl.u32 %v749, 7
        %v751 = vsub.s32 0, %v750
        %v752 = vrot.slane %v748, %v751
        %v753 = vmul.f32 %v297, %v752
        %v754 = vmul.f32 %v298, %v752
        %v755 = vmul.f32 %v299, %v752
        %v756 = vmul.f32 %v300, %v752
        %v757 = vmul.f32 %v301, %v752
        %v758 = vmul.f32 %v302, %v752
        %v759 = vmul.f32 %v303, %v752
        %v760 = vmul.f32 %v304, %v752
        %v761 = vmul.f32 %v305, %v752
        %v762 = vmul.f32 %v306, %v752
        %v763 = vmul.f32 %v307, %v752
        %v764 = vmul.f32 %v308, %v752
        %v765 = vmul.f32 %v309, %v752
        %v766 = vmul.f32 %v310, %v752
        %v767 = vmul.f32 %v311, %v752
        %v768 = vmul.f32 %v312, %v752
        %v785 = vrot.slane %v753, 3
        %v786 = vrot.slane %v754, 3
        %v787 = vsel %vm531, %v785, %v786
        %v788 = vrot.slane %v755, 3
        %v789 = vrot.slane %v756, 3
        %v790 = vsel %vm531, %v788, %v789
        %v791 = vrot.slane %v757, 3
        %v792 = vrot.slane %v758, 3
        %v793 = vsel %vm531, %v791, %v792
        %v794 = vrot.slane %v759, 3
        %v795 = vrot.slane %v760, 3
        %v796 = vsel %vm531, %v794, %v795
        %v797 = vrot.slane %v761, 3
        %v798 = vrot.slane %v762, 3
        %v799 = vsel %vm531, %v797, %v798
        %v800 = vrot.slane %v763, 3
        %v801 = vrot.slane %v764, 3
        %v802 = vsel %vm531, %v800, %v801
        %v803 = vrot.slane %v765, 3
        %v804 = vrot.slane %v766, 3
        %v805 = vsel %vm531, %v803, %v804
        %v806 = vrot.slane %v767, 3
        %v807 = vrot.slane %v768, 3
        %v808 = vsel %vm531, %v806, %v807
        %v817 = vadd.f32 %v740, %v787
        %v818 = vadd.f32 %v741, %v790
        %v819 = vadd.f32 %v742, %v793
        %v820 = vadd.f32 %v743, %v796
        %v821 = vadd.f32 %v744, %v799
        %v822 = vadd.f32 %v745, %v802
        %v823 = vadd.f32 %v746, %v805
        %v824 = vadd.f32 %v747, %v808
        %s825 = scalar_lea.vmem [#allocation5], 8
        %v826 = vld [vmem:[%s825] sm:$0x1]
        %v827 = vlaneseq
        %v828 = vshrl.u32 %v827, 7
        %v829 = vsub.s32 0, %v828
        %v830 = vrot.slane %v826, %v829
        %v831 = vmul.f32 %v299, %v830
        %v832 = vmul.f32 %v301, %v830
        %v833 = vmul.f32 %v303, %v830
        %v834 = vmul.f32 %v305, %v830
        %v835 = vmul.f32 %v307, %v830
        %v836 = vmul.f32 %v309, %v830
        %v837 = vmul.f32 %v311, %v830
        %v838 = vmul.f32 %v313, %v830
        %v839 = vadd.f32 %v817, %v831
        %v840 = vadd.f32 %v818, %v832
        %v841 = vadd.f32 %v819, %v833
        %v842 = vadd.f32 %v820, %v834
        %v843 = vadd.f32 %v821, %v835
        %v844 = vadd.f32 %v822, %v836
        %v845 = vadd.f32 %v823, %v837
        %v846 = vadd.f32 %v824, %v838
        %v847 = vld [vmem:[%s825 + $0x1] sm:$0x1]
        %v848 = vlaneseq
        %v849 = vshrl.u32 %v848, 7
        %v850 = vsub.s32 0, %v849
        %v851 = vrot.slane %v847, %v850
        %v852 = vmul.f32 %v299, %v851
        %v853 = vmul.f32 %v300, %v851
        %v854 = vmul.f32 %v301, %v851
        %v855 = vmul.f32 %v302, %v851
        %v856 = vmul.f32 %v303, %v851
        %v857 = vmul.f32 %v304, %v851
        %v858 = vmul.f32 %v305, %v851
        %v859 = vmul.f32 %v306, %v851
        %v860 = vmul.f32 %v307, %v851
        %v861 = vmul.f32 %v308, %v851
        %v862 = vmul.f32 %v309, %v851
        %v863 = vmul.f32 %v310, %v851
        %v864 = vmul.f32 %v311, %v851
        %v865 = vmul.f32 %v312, %v851
        %v866 = vmul.f32 %v313, %v851
        %v867 = vmul.f32 %v314, %v851
        %v884 = vrot.slane %v852, 1
        %v885 = vrot.slane %v853, 1
        %v886 = vsel %vm375, %v884, %v885
        %v887 = vrot.slane %v854, 1
        %v888 = vrot.slane %v855, 1
        %v889 = vsel %vm375, %v887, %v888
        %v890 = vrot.slane %v856, 1
        %v891 = vrot.slane %v857, 1
        %v892 = vsel %vm375, %v890, %v891
        %v893 = vrot.slane %v858, 1
        %v894 = vrot.slane %v859, 1
        %v895 = vsel %vm375, %v893, %v894
        %v896 = vrot.slane %v860, 1
        %v897 = vrot.slane %v861, 1
        %v898 = vsel %vm375, %v896, %v897
        %v899 = vrot.slane %v862, 1
        %v900 = vrot.slane %v863, 1
        %v901 = vsel %vm375, %v899, %v900
        %v902 = vrot.slane %v864, 1
        %v903 = vrot.slane %v865, 1
        %v904 = vsel %vm375, %v902, %v903
        %v905 = vrot.slane %v866, 1
        %v906 = vrot.slane %v867, 1
        %v907 = vsel %vm375, %v905, %v906
        %v916 = vadd.f32 %v839, %v886
        %v917 = vadd.f32 %v840, %v889
        %v918 = vadd.f32 %v841, %v892
        %v919 = vadd.f32 %v842, %v895
        %v920 = vadd.f32 %v843, %v898
        %v921 = vadd.f32 %v844, %v901
        %v922 = vadd.f32 %v845, %v904
        %v923 = vadd.f32 %v846, %v907
        %v924 = vld [vmem:[%s825 + $0x2] sm:$0x1]
        %v925 = vlaneseq
        %v926 = vshrl.u32 %v925, 7
        %v927 = vsub.s32 0, %v926
        %v928 = vrot.slane %v924, %v927
        %v929 = vmul.f32 %v299, %v928
        %v930 = vmul.f32 %v300, %v928
        %v931 = vmul.f32 %v301, %v928
        %v932 = vmul.f32 %v302, %v928
        %v933 = vmul.f32 %v303, %v928
        %v934 = vmul.f32 %v304, %v928
        %v935 = vmul.f32 %v305, %v928
        %v936 = vmul.f32 %v306, %v928
        %v937 = vmul.f32 %v307, %v928
        %v938 = vmul.f32 %v308, %v928
        %v939 = vmul.f32 %v309, %v928
        %v940 = vmul.f32 %v310, %v928
        %v941 = vmul.f32 %v311, %v928
        %v942 = vmul.f32 %v312, %v928
        %v943 = vmul.f32 %v313, %v928
        %v944 = vmul.f32 %v314, %v928
        %v961 = vrot.slane %v929, 2
        %v962 = vrot.slane %v930, 2
        %v963 = vsel %vm453, %v961, %v962
        %v964 = vrot.slane %v931, 2
        %v965 = vrot.slane %v932, 2
        %v966 = vsel %vm453, %v964, %v965
        %v967 = vrot.slane %v933, 2
        %v968 = vrot.slane %v934, 2
        %v969 = vsel %vm453, %v967, %v968
        %v970 = vrot.slane %v935, 2
        %v971 = vrot.slane %v936, 2
        %v972 = vsel %vm453, %v970, %v971
        %v973 = vrot.slane %v937, 2
        %v974 = vrot.slane %v938, 2
        %v975 = vsel %vm453, %v973, %v974
        %v976 = vrot.slane %v939, 2
        %v977 = vrot.slane %v940, 2
        %v978 = vsel %vm453, %v976, %v977
        %v979 = vrot.slane %v941, 2
        %v980 = vrot.slane %v942, 2
        %v981 = vsel %vm453, %v979, %v980
        %v982 = vrot.slane %v943, 2
        %v983 = vrot.slane %v944, 2
        %v984 = vsel %vm453, %v982, %v983
        %v993 = vadd.f32 %v916, %v963
        %v994 = vadd.f32 %v917, %v966
        %v995 = vadd.f32 %v918, %v969
        %v996 = vadd.f32 %v919, %v972
        %v997 = vadd.f32 %v920, %v975
        %v998 = vadd.f32 %v921, %v978
        %v999 = vadd.f32 %v922, %v981
        %v1000 = vadd.f32 %v923, %v984
        %v1001 = vld [vmem:[%s825 + $0x3] sm:$0x1]
        %v1002 = vlaneseq
        %v1003 = vshrl.u32 %v1002, 7
        %v1004 = vsub.s32 0, %v1003
        %v1005 = vrot.slane %v1001, %v1004
        %v1006 = vmul.f32 %v299, %v1005
        %v1007 = vmul.f32 %v300, %v1005
        %v1008 = vmul.f32 %v301, %v1005
        %v1009 = vmul.f32 %v302, %v1005
        %v1010 = vmul.f32 %v303, %v1005
        %v1011 = vmul.f32 %v304, %v1005
        %v1012 = vmul.f32 %v305, %v1005
        %v1013 = vmul.f32 %v306, %v1005
        %v1014 = vmul.f32 %v307, %v1005
        %v1015 = vmul.f32 %v308, %v1005
        %v1016 = vmul.f32 %v309, %v1005
        %v1017 = vmul.f32 %v310, %v1005
        %v1018 = vmul.f32 %v311, %v1005
        %v1019 = vmul.f32 %v312, %v1005
        %v1020 = vmul.f32 %v313, %v1005
        %v1021 = vmul.f32 %v314, %v1005
        %v1038 = vrot.slane %v1006, 3
        %v1039 = vrot.slane %v1007, 3
        %v1040 = vsel %vm531, %v1038, %v1039
        %v1041 = vrot.slane %v1008, 3
        %v1042 = vrot.slane %v1009, 3
        %v1043 = vsel %vm531, %v1041, %v1042
        %v1044 = vrot.slane %v1010, 3
        %v1045 = vrot.slane %v1011, 3
        %v1046 = vsel %vm531, %v1044, %v1045
        %v1047 = vrot.slane %v1012, 3
        %v1048 = vrot.slane %v1013, 3
        %v1049 = vsel %vm531, %v1047, %v1048
        %v1050 = vrot.slane %v1014, 3
        %v1051 = vrot.slane %v1015, 3
        %v1052 = vsel %vm531, %v1050, %v1051
        %v1053 = vrot.slane %v1016, 3
        %v1054 = vrot.slane %v1017, 3
        %v1055 = vsel %vm531, %v1053, %v1054
        %v1056 = vrot.slane %v1018, 3
        %v1057 = vrot.slane %v1019, 3
        %v1058 = vsel %vm531, %v1056, %v1057
        %v1059 = vrot.slane %v1020, 3
        %v1060 = vrot.slane %v1021, 3
        %v1061 = vsel %vm531, %v1059, %v1060
        %v1070 = vadd.f32 %v993, %v1040
        %v1071 = vadd.f32 %v994, %v1043
        %v1072 = vadd.f32 %v995, %v1046
        %v1073 = vadd.f32 %v996, %v1049
        %v1074 = vadd.f32 %v997, %v1052
        %v1075 = vadd.f32 %v998, %v1055
        %v1076 = vadd.f32 %v999, %v1058
        %v1077 = vadd.f32 %v1000, %v1061
        %s1078 = scalar_lea.vmem [#allocation5], 12
        %v1079 = vld [vmem:[%s1078] sm:$0x1]
        %v1080 = vlaneseq
        %v1081 = vshrl.u32 %v1080, 7
        %v1082 = vsub.s32 0, %v1081
        %v1083 = vrot.slane %v1079, %v1082
        %v1084 = vmul.f32 %v301, %v1083
        %v1085 = vmul.f32 %v303, %v1083
        %v1086 = vmul.f32 %v305, %v1083
        %v1087 = vmul.f32 %v307, %v1083
        %v1088 = vmul.f32 %v309, %v1083
        %v1089 = vmul.f32 %v311, %v1083
        %v1090 = vmul.f32 %v313, %v1083
        %v1091 = vmul.f32 %v315, %v1083
        %v1092 = vadd.f32 %v1070, %v1084
        %v1093 = vadd.f32 %v1071, %v1085
        %v1094 = vadd.f32 %v1072, %v1086
        %v1095 = vadd.f32 %v1073, %v1087
        %v1096 = vadd.f32 %v1074, %v1088
        %v1097 = vadd.f32 %v1075, %v1089
        %v1098 = vadd.f32 %v1076, %v1090
        %v1099 = vadd.f32 %v1077, %v1091
        %v1100 = vld [vmem:[%s1078 + $0x1] sm:$0x1]
        %v1101 = vlaneseq
        %v1102 = vshrl.u32 %v1101, 7
        %v1103 = vsub.s32 0, %v1102
        %v1104 = vrot.slane %v1100, %v1103
        %v1105 = vmul.f32 %v301, %v1104
        %v1106 = vmul.f32 %v302, %v1104
        %v1107 = vmul.f32 %v303, %v1104
        %v1108 = vmul.f32 %v304, %v1104
        %v1109 = vmul.f32 %v305, %v1104
        %v1110 = vmul.f32 %v306, %v1104
        %v1111 = vmul.f32 %v307, %v1104
        %v1112 = vmul.f32 %v308, %v1104
        %v1113 = vmul.f32 %v309, %v1104
        %v1114 = vmul.f32 %v310, %v1104
        %v1115 = vmul.f32 %v311, %v1104
        %v1116 = vmul.f32 %v312, %v1104
        %v1117 = vmul.f32 %v313, %v1104
        %v1118 = vmul.f32 %v314, %v1104
        %v1119 = vmul.f32 %v315, %v1104
        %v1120 = vmul.f32 %v316, %v1104
        %v1137 = vrot.slane %v1105, 1
        %v1138 = vrot.slane %v1106, 1
        %v1139 = vsel %vm375, %v1137, %v1138
        %v1140 = vrot.slane %v1107, 1
        %v1141 = vrot.slane %v1108, 1
        %v1142 = vsel %vm375, %v1140, %v1141
        %v1143 = vrot.slane %v1109, 1
        %v1144 = vrot.slane %v1110, 1
        %v1145 = vsel %vm375, %v1143, %v1144
        %v1146 = vrot.slane %v1111, 1
        %v1147 = vrot.slane %v1112, 1
        %v1148 = vsel %vm375, %v1146, %v1147
        %v1149 = vrot.slane %v1113, 1
        %v1150 = vrot.slane %v1114, 1
        %v1151 = vsel %vm375, %v1149, %v1150
        %v1152 = vrot.slane %v1115, 1
        %v1153 = vrot.slane %v1116, 1
        %v1154 = vsel %vm375, %v1152, %v1153
        %v1155 = vrot.slane %v1117, 1
        %v1156 = vrot.slane %v1118, 1
        %v1157 = vsel %vm375, %v1155, %v1156
        %v1158 = vrot.slane %v1119, 1
        %v1159 = vrot.slane %v1120, 1
        %v1160 = vsel %vm375, %v1158, %v1159
        %v1169 = vadd.f32 %v1092, %v1139
        %v1170 = vadd.f32 %v1093, %v1142
        %v1171 = vadd.f32 %v1094, %v1145
        %v1172 = vadd.f32 %v1095, %v1148
        %v1173 = vadd.f32 %v1096, %v1151
        %v1174 = vadd.f32 %v1097, %v1154
        %v1175 = vadd.f32 %v1098, %v1157
        %v1176 = vadd.f32 %v1099, %v1160
        %v1177 = vld [vmem:[%s1078 + $0x2] sm:$0x1]
        %v1178 = vlaneseq
        %v1179 = vshrl.u32 %v1178, 7
        %v1180 = vsub.s32 0, %v1179
        %v1181 = vrot.slane %v1177, %v1180
        %v1182 = vmul.f32 %v301, %v1181
        %v1183 = vmul.f32 %v302, %v1181
        %v1184 = vmul.f32 %v303, %v1181
        %v1185 = vmul.f32 %v304, %v1181
        %v1186 = vmul.f32 %v305, %v1181
        %v1187 = vmul.f32 %v306, %v1181
        %v1188 = vmul.f32 %v307, %v1181
        %v1189 = vmul.f32 %v308, %v1181
        %v1190 = vmul.f32 %v309, %v1181
        %v1191 = vmul.f32 %v310, %v1181
        %v1192 = vmul.f32 %v311, %v1181
        %v1193 = vmul.f32 %v312, %v1181
        %v1194 = vmul.f32 %v313, %v1181
        %v1195 = vmul.f32 %v314, %v1181
        %v1196 = vmul.f32 %v315, %v1181
        %v1197 = vmul.f32 %v316, %v1181
        %v1214 = vrot.slane %v1182, 2
        %v1215 = vrot.slane %v1183, 2
        %v1216 = vsel %vm453, %v1214, %v1215
        %v1217 = vrot.slane %v1184, 2
        %v1218 = vrot.slane %v1185, 2
        %v1219 = vsel %vm453, %v1217, %v1218
        %v1220 = vrot.slane %v1186, 2
        %v1221 = vrot.slane %v1187, 2
        %v1222 = vsel %vm453, %v1220, %v1221
        %v1223 = vrot.slane %v1188, 2
        %v1224 = vrot.slane %v1189, 2
        %v1225 = vsel %vm453, %v1223, %v1224
        %v1226 = vrot.slane %v1190, 2
        %v1227 = vrot.slane %v1191, 2
        %v1228 = vsel %vm453, %v1226, %v1227
        %v1229 = vrot.slane %v1192, 2
        %v1230 = vrot.slane %v1193, 2
        %v1231 = vsel %vm453, %v1229, %v1230
        %v1232 = vrot.slane %v1194, 2
        %v1233 = vrot.slane %v1195, 2
        %v1234 = vsel %vm453, %v1232, %v1233
        %v1235 = vrot.slane %v1196, 2
        %v1236 = vrot.slane %v1197, 2
        %v1237 = vsel %vm453, %v1235, %v1236
        %v1246 = vadd.f32 %v1169, %v1216
        %v1247 = vadd.f32 %v1170, %v1219
        %v1248 = vadd.f32 %v1171, %v1222
        %v1249 = vadd.f32 %v1172, %v1225
        %v1250 = vadd.f32 %v1173, %v1228
        %v1251 = vadd.f32 %v1174, %v1231
        %v1252 = vadd.f32 %v1175, %v1234
        %v1253 = vadd.f32 %v1176, %v1237
        %v1254 = vld [vmem:[%s1078 + $0x3] sm:$0x1]
        %v1255 = vlaneseq
        %v1256 = vshrl.u32 %v1255, 7
        %v1257 = vsub.s32 0, %v1256
        %v1258 = vrot.slane %v1254, %v1257
        %v1259 = vmul.f32 %v301, %v1258
        %v1260 = vmul.f32 %v302, %v1258
        %v1261 = vmul.f32 %v303, %v1258
        %v1262 = vmul.f32 %v304, %v1258
        %v1263 = vmul.f32 %v305, %v1258
        %v1264 = vmul.f32 %v306, %v1258
        %v1265 = vmul.f32 %v307, %v1258
        %v1266 = vmul.f32 %v308, %v1258
        %v1267 = vmul.f32 %v309, %v1258
        %v1268 = vmul.f32 %v310, %v1258
        %v1269 = vmul.f32 %v311, %v1258
        %v1270 = vmul.f32 %v312, %v1258
        %v1271 = vmul.f32 %v313, %v1258
        %v1272 = vmul.f32 %v314, %v1258
        %v1273 = vmul.f32 %v315, %v1258
        %v1274 = vmul.f32 %v316, %v1258
        %v1291 = vrot.slane %v1259, 3
        %v1292 = vrot.slane %v1260, 3
        %v1293 = vsel %vm531, %v1291, %v1292
        %v1294 = vrot.slane %v1261, 3
        %v1295 = vrot.slane %v1262, 3
        %v1296 = vsel %vm531, %v1294, %v1295
        %v1297 = vrot.slane %v1263, 3
        %v1298 = vrot.slane %v1264, 3
        %v1299 = vsel %vm531, %v1297, %v1298
        %v1300 = vrot.slane %v1265, 3
        %v1301 = vrot.slane %v1266, 3
        %v1302 = vsel %vm531, %v1300, %v1301
        %v1303 = vrot.slane %v1267, 3
        %v1304 = vrot.slane %v1268, 3
        %v1305 = vsel %vm531, %v1303, %v1304
        %v1306 = vrot.slane %v1269, 3
        %v1307 = vrot.slane %v1270, 3
        %v1308 = vsel %vm531, %v1306, %v1307
        %v1309 = vrot.slane %v1271, 3
        %v1310 = vrot.slane %v1272, 3
        %v1311 = vsel %vm531, %v1309, %v1310
        %v1312 = vrot.slane %v1273, 3
        %v1313 = vrot.slane %v1274, 3
        %v1314 = vsel %vm531, %v1312, %v1313
        %v1323 = vadd.f32 %v1246, %v1293
        %v1324 = vadd.f32 %v1247, %v1296
        %v1325 = vadd.f32 %v1248, %v1299
        %v1326 = vadd.f32 %v1249, %v1302
        %v1327 = vadd.f32 %v1250, %v1305
        %v1328 = vadd.f32 %v1251, %v1308
        %v1329 = vadd.f32 %v1252, %v1311
        %v1330 = vadd.f32 %v1253, %v1314
        %v1331 = vld [vmem:[#allocation7] sm:$0x1]
        %v1333 = vlaneseq
        %v1334 = vshrl.u32 %v1333, 7
        %v1335 = vsub.s32 0, %v1334
        %v1336 = vrot.slane %v1331, %v1335
        %v1338 = vadd.f32 %v1323, %v1336
        %v1339 = vadd.f32 %v1324, %v1336
        %v1340 = vadd.f32 %v1325, %v1336
        %v1341 = vadd.f32 %v1326, %v1336
        %v1342 = vadd.f32 %v1327, %v1336
        %v1343 = vadd.f32 %v1328, %v1336
        %v1344 = vadd.f32 %v1329, %v1336
        %v1345 = vadd.f32 %v1330, %v1336
        %vm1346 = vcmask 261120
        %v1347 = vsel %vm1346, %v1338, 0.0
        %1348 = vadd.xlane.f32.xlu0 %v1347
        %v1349 = vpop.xlane.xlu0 %1348
        %v1350 = vsel %vm1346, %v1339, 0.0
        %1351 = vadd.xlane.f32.xlu0 %v1350
        %v1352 = vpop.xlane.xlu0 %1351
        %v1353 = vsel %vm1346, %v1340, 0.0
        %1354 = vadd.xlane.f32.xlu0 %v1353
        %v1355 = vpop.xlane.xlu0 %1354
        %v1356 = vsel %vm1346, %v1341, 0.0
        %1357 = vadd.xlane.f32.xlu0 %v1356
        %v1358 = vpop.xlane.xlu0 %1357
        %v1359 = vsel %vm1346, %v1342, 0.0
        %1360 = vadd.xlane.f32.xlu0 %v1359
        %v1361 = vpop.xlane.xlu0 %1360
        %v1362 = vsel %vm1346, %v1343, 0.0
        %1363 = vadd.xlane.f32.xlu0 %v1362
        %v1364 = vpop.xlane.xlu0 %1363
        %v1365 = vsel %vm1346, %v1344, 0.0
        %1366 = vadd.xlane.f32.xlu0 %v1365
        %v1367 = vpop.xlane.xlu0 %1366
        %v1368 = vsel %vm1346, %v1345, 0.0
        %1369 = vadd.xlane.f32.xlu0 %v1368
        %v1370 = vpop.xlane.xlu0 %1369
        %v1371 = vrcp.pop 32.0
        %v1372 = vmul.f32 %v1349, %v1371
        %v1373 = vmul.f32 %v1352, %v1371
        %v1374 = vmul.f32 %v1355, %v1371
        %v1375 = vmul.f32 %v1358, %v1371
        %v1376 = vmul.f32 %v1361, %v1371
        %v1377 = vmul.f32 %v1364, %v1371
        %v1378 = vmul.f32 %v1367, %v1371
        %v1379 = vmul.f32 %v1370, %v1371
        %v1380 = vsub.f32 %v1338, %v1372
        %v1381 = vsub.f32 %v1339, %v1373
        %v1382 = vsub.f32 %v1340, %v1374
        %v1383 = vsub.f32 %v1341, %v1375
        %v1384 = vsub.f32 %v1342, %v1376
        %v1385 = vsub.f32 %v1343, %v1377
        %v1386 = vsub.f32 %v1344, %v1378
        %v1387 = vsub.f32 %v1345, %v1379
        %v1388 = vmul.f32 %v1380, %v1380
        %v1389 = vmul.f32 %v1381, %v1381
        %v1390 = vmul.f32 %v1382, %v1382
        %v1391 = vmul.f32 %v1383, %v1383
        %v1392 = vmul.f32 %v1384, %v1384
        %v1393 = vmul.f32 %v1385, %v1385
        %v1394 = vmul.f32 %v1386, %v1386
        %v1395 = vmul.f32 %v1387, %v1387
        %v1396 = vsel %vm1346, %v1388, 0.0
        %1397 = vadd.xlane.f32.xlu0 %v1396
        %v1398 = vpop.xlane.xlu0 %1397
        %v1399 = vsel %vm1346, %v1389, 0.0
        %1400 = vadd.xlane.f32.xlu0 %v1399
        %v1401 = vpop.xlane.xlu0 %1400
        %v1402 = vsel %vm1346, %v1390, 0.0
        %1403 = vadd.xlane.f32.xlu0 %v1402
        %v1404 = vpop.xlane.xlu0 %1403
        %v1405 = vsel %vm1346, %v1391, 0.0
        %1406 = vadd.xlane.f32.xlu0 %v1405
        %v1407 = vpop.xlane.xlu0 %1406
        %v1408 = vsel %vm1346, %v1392, 0.0
        %1409 = vadd.xlane.f32.xlu0 %v1408
        %v1410 = vpop.xlane.xlu0 %1409
        %v1411 = vsel %vm1346, %v1393, 0.0
        %1412 = vadd.xlane.f32.xlu0 %v1411
        %v1413 = vpop.xlane.xlu0 %1412
        %v1414 = vsel %vm1346, %v1394, 0.0
        %1415 = vadd.xlane.f32.xlu0 %v1414
        %v1416 = vpop.xlane.xlu0 %1415
        %v1417 = vsel %vm1346, %v1395, 0.0
        %1418 = vadd.xlane.f32.xlu0 %v1417
        %v1419 = vpop.xlane.xlu0 %1418
        %v1420 = vmul.f32 %v1398, %v1371
        %v1421 = vmul.f32 %v1401, %v1371
        %v1422 = vmul.f32 %v1404, %v1371
        %v1423 = vmul.f32 %v1407, %v1371
        %v1424 = vmul.f32 %v1410, %v1371
        %v1425 = vmul.f32 %v1413, %v1371
        %v1426 = vmul.f32 %v1416, %v1371
        %v1427 = vmul.f32 %v1419, %v1371
        %v1428 = vadd.f32 %v1420, 1e-06
        %v1429 = vadd.f32 %v1421, 1e-06
        %v1430 = vadd.f32 %v1422, 1e-06
        %v1431 = vadd.f32 %v1423, 1e-06
        %v1432 = vadd.f32 %v1424, 1e-06
        %v1433 = vadd.f32 %v1425, 1e-06
        %v1434 = vadd.f32 %v1426, 1e-06
        %v1435 = vadd.f32 %v1427, 1e-06
        %v1436 = vrsqrt.pop %v1428
        %v1437 = vrsqrt.pop %v1429
        %v1438 = vrsqrt.pop %v1430
        %v1439 = vrsqrt.pop %v1431
        %v1440 = vrsqrt.pop %v1432
        %v1441 = vrsqrt.pop %v1433
        %v1442 = vrsqrt.pop %v1434
        %v1443 = vrsqrt.pop %v1435
        %v1444 = vmul.f32 %v1380, %v1436
        %v1445 = vmul.f32 %v1381, %v1437
        %v1446 = vmul.f32 %v1382, %v1438
        %v1447 = vmul.f32 %v1383, %v1439
        %v1448 = vmul.f32 %v1384, %v1440
        %v1449 = vmul.f32 %v1385, %v1441
        %v1450 = vmul.f32 %v1386, %v1442
        %v1451 = vmul.f32 %v1387, %v1443
        %v1452 = vld [vmem:[#allocation8] sm:$0x1]
        %v1454 = vlaneseq
        %v1455 = vshrl.u32 %v1454, 7
        %v1456 = vsub.s32 0, %v1455
        %v1457 = vrot.slane %v1452, %v1456
        %v1459 = vmul.f32 %v1444, %v1457
        %v1460 = vmul.f32 %v1445, %v1457
        %v1461 = vmul.f32 %v1446, %v1457
        %v1462 = vmul.f32 %v1447, %v1457
        %v1463 = vmul.f32 %v1448, %v1457
        %v1464 = vmul.f32 %v1449, %v1457
        %v1465 = vmul.f32 %v1450, %v1457
        %v1466 = vmul.f32 %v1451, %v1457
        %v1467 = vld [vmem:[#allocation10] sm:$0x1]
        %v1469 = vlaneseq
        %v1470 = vshrl.u32 %v1469, 7
        %v1471 = vsub.s32 0, %v1470
        %v1472 = vrot.slane %v1467, %v1471
        %v1474 = vadd.f32 %v1459, %v1472
        %v1475 = vadd.f32 %v1460, %v1472
        %v1476 = vadd.f32 %v1461, %v1472
        %v1477 = vadd.f32 %v1462, %v1472
        %v1478 = vadd.f32 %v1463, %v1472
        %v1479 = vadd.f32 %v1464, %v1472
        %v1480 = vadd.f32 %v1465, %v1472
        %v1481 = vadd.f32 %v1466, %v1472
        %v1482 = vmul.f32 %v1474, 0.5
        %v1483 = vmul.f32 %v1475, 0.5
        %v1484 = vmul.f32 %v1476, 0.5
        %v1485 = vmul.f32 %v1477, 0.5
        %v1486 = vmul.f32 %v1478, 0.5
        %v1487 = vmul.f32 %v1479, 0.5
        %v1488 = vmul.f32 %v1480, 0.5
        %v1489 = vmul.f32 %v1481, 0.5
        %v1490 = vmul.f32 %v1474, 0.70710677
        %v1491 = vmul.f32 %v1475, 0.70710677
        %v1492 = vmul.f32 %v1476, 0.70710677
        %v1493 = vmul.f32 %v1477, 0.70710677
        %v1494 = vmul.f32 %v1478, 0.70710677
        %v1495 = vmul.f32 %v1479, 0.70710677
        %v1496 = vmul.f32 %v1480, 0.70710677
        %v1497 = vmul.f32 %v1481, 0.70710677
        %v1498 = vand.u32 2147483647, %v1490
        %v1499 = vand.u32 2147483647, %v1491
        %v1500 = vand.u32 2147483647, %v1492
        %v1501 = vand.u32 2147483647, %v1493
        %v1502 = vand.u32 2147483647, %v1494
        %v1503 = vand.u32 2147483647, %v1495
        %v1504 = vand.u32 2147483647, %v1496
        %v1505 = vand.u32 2147483647, %v1497
        %v1506 = vmul.f32 %v1498, 0.3275911
        %v1507 = vmul.f32 %v1499, 0.3275911
        %v1508 = vmul.f32 %v1500, 0.3275911
        %v1509 = vmul.f32 %v1501, 0.3275911
        %v1510 = vmul.f32 %v1502, 0.3275911
        %v1511 = vmul.f32 %v1503, 0.3275911
        %v1512 = vmul.f32 %v1504, 0.3275911
        %v1513 = vmul.f32 %v1505, 0.3275911
        %v1514 = vadd.f32 %v1506, 1.0
        %v1515 = vadd.f32 %v1507, 1.0
        %v1516 = vadd.f32 %v1508, 1.0
        %v1517 = vadd.f32 %v1509, 1.0
        %v1518 = vadd.f32 %v1510, 1.0
        %v1519 = vadd.f32 %v1511, 1.0
        %v1520 = vadd.f32 %v1512, 1.0
        %v1521 = vadd.f32 %v1513, 1.0
        %v1522 = vrcp.pop %v1514
        %v1523 = vmul.f32 1.0, %v1522
        %v1524 = vrcp.pop %v1515
        %v1525 = vmul.f32 1.0, %v1524
        %v1526 = vrcp.pop %v1516
        %v1527 = vmul.f32 1.0, %v1526
        %v1528 = vrcp.pop %v1517
        %v1529 = vmul.f32 1.0, %v1528
        %v1530 = vrcp.pop %v1518
        %v1531 = vmul.f32 1.0, %v1530
        %v1532 = vrcp.pop %v1519
        %v1533 = vmul.f32 1.0, %v1532
        %v1534 = vrcp.pop %v1520
        %v1535 = vmul.f32 1.0, %v1534
        %v1536 = vrcp.pop %v1521
        %v1537 = vmul.f32 1.0, %v1536
        %v1538 = vmul.f32 %v1523, 1.0614054
        %v1539 = vmul.f32 %v1525, 1.0614054
        %v1540 = vmul.f32 %v1527, 1.0614054
        %v1541 = vmul.f32 %v1529, 1.0614054
        %v1542 = vmul.f32 %v1531, 1.0614054
        %v1543 = vmul.f32 %v1533, 1.0614054
        %v1544 = vmul.f32 %v1535, 1.0614054
        %v1545 = vmul.f32 %v1537, 1.0614054
        %v1546 = vadd.f32 %v1538, -1.4531521
        %v1547 = vadd.f32 %v1539, -1.4531521
        %v1548 = vadd.f32 %v1540, -1.4531521
        %v1549 = vadd.f32 %v1541, -1.4531521
        %v1550 = vadd.f32 %v1542, -1.4531521
        %v1551 = vadd.f32 %v1543, -1.4531521
        %v1552 = vadd.f32 %v1544, -1.4531521
        %v1553 = vadd.f32 %v1545, -1.4531521
        %v1554 = vmul.f32 %v1546, %v1523
        %v1555 = vmul.f32 %v1547, %v1525
        %v1556 = vmul.f32 %v1548, %v1527
        %v1557 = vmul.f32 %v1549, %v1529
        %v1558 = vmul.f32 %v1550, %v1531
        %v1559 = vmul.f32 %v1551, %v1533
        %v1560 = vmul.f32 %v1552, %v1535
        %v1561 = vmul.f32 %v1553, %v1537
        %v1562 = vadd.f32 %v1554, 1.4214138
        %v1563 = vadd.f32 %v1555, 1.4214138
        %v1564 = vadd.f32 %v1556, 1.4214138
        %v1565 = vadd.f32 %v1557, 1.4214138
        %v1566 = vadd.f32 %v1558, 1.4214138
        %v1567 = vadd.f32 %v1559, 1.4214138
        %v1568 = vadd.f32 %v1560, 1.4214138
        %v1569 = vadd.f32 %v1561, 1.4214138
        %v1570 = vmul.f32 %v1562, %v1523
        %v1571 = vmul.f32 %v1563, %v1525
        %v1572 = vmul.f32 %v1564, %v1527
        %v1573 = vmul.f32 %v1565, %v1529
        %v1574 = vmul.f32 %v1566, %v1531
        %v1575 = vmul.f32 %v1567, %v1533
        %v1576 = vmul.f32 %v1568, %v1535
        %v1577 = vmul.f32 %v1569, %v1537
        %v1578 = vadd.f32 %v1570, -0.28449672
        %v1579 = vadd.f32 %v1571, -0.28449672
        %v1580 = vadd.f32 %v1572, -0.28449672
        %v1581 = vadd.f32 %v1573, -0.28449672
        %v1582 = vadd.f32 %v1574, -0.28449672
        %v1583 = vadd.f32 %v1575, -0.28449672
        %v1584 = vadd.f32 %v1576, -0.28449672
        %v1585 = vadd.f32 %v1577, -0.28449672
        %v1586 = vmul.f32 %v1578, %v1523
        %v1587 = vmul.f32 %v1579, %v1525
        %v1588 = vmul.f32 %v1580, %v1527
        %v1589 = vmul.f32 %v1581, %v1529
        %v1590 = vmul.f32 %v1582, %v1531
        %v1591 = vmul.f32 %v1583, %v1533
        %v1592 = vmul.f32 %v1584, %v1535
        %v1593 = vmul.f32 %v1585, %v1537
        %v1594 = vadd.f32 %v1586, 0.2548296
        %v1595 = vadd.f32 %v1587, 0.2548296
        %v1596 = vadd.f32 %v1588, 0.2548296
        %v1597 = vadd.f32 %v1589, 0.2548296
        %v1598 = vadd.f32 %v1590, 0.2548296
        %v1599 = vadd.f32 %v1591, 0.2548296
        %v1600 = vadd.f32 %v1592, 0.2548296
        %v1601 = vadd.f32 %v1593, 0.2548296
        %v1602 = vmul.f32 %v1594, %v1523
        %v1603 = vmul.f32 %v1595, %v1525
        %v1604 = vmul.f32 %v1596, %v1527
        %v1605 = vmul.f32 %v1597, %v1529
        %v1606 = vmul.f32 %v1598, %v1531
        %v1607 = vmul.f32 %v1599, %v1533
        %v1608 = vmul.f32 %v1600, %v1535
        %v1609 = vmul.f32 %v1601, %v1537
        %v1610 = vsub.f32 0.0, %v1498
        %v1611 = vsub.f32 0.0, %v1499
        %v1612 = vsub.f32 0.0, %v1500
        %v1613 = vsub.f32 0.0, %v1501
        %v1614 = vsub.f32 0.0, %v1502
        %v1615 = vsub.f32 0.0, %v1503
        %v1616 = vsub.f32 0.0, %v1504
        %v1617 = vsub.f32 0.0, %v1505
        %v1618 = vmul.f32 %v1610, %v1498
        %v1619 = vmul.f32 %v1611, %v1499
        %v1620 = vmul.f32 %v1612, %v1500
        %v1621 = vmul.f32 %v1613, %v1501
        %v1622 = vmul.f32 %v1614, %v1502
        %v1623 = vmul.f32 %v1615, %v1503
        %v1624 = vmul.f32 %v1616, %v1504
        %v1625 = vmul.f32 %v1617, %v1505
        %v1626 = vmul.f32 %v1618, 1.442695
        %v1627 = vpow.pop %v1626
        %v1628 = vmul.f32 %v1619, 1.442695
        %v1629 = vpow.pop %v1628
        %v1630 = vmul.f32 %v1620, 1.442695
        %v1631 = vpow.pop %v1630
        %v1632 = vmul.f32 %v1621, 1.442695
        %v1633 = vpow.pop %v1632
        %v1634 = vmul.f32 %v1622, 1.442695
        %v1635 = vpow.pop %v1634
        %v1636 = vmul.f32 %v1623, 1.442695
        %v1637 = vpow.pop %v1636
        %v1638 = vmul.f32 %v1624, 1.442695
        %v1639 = vpow.pop %v1638
        %v1640 = vmul.f32 %v1625, 1.442695
        %v1641 = vpow.pop %v1640
        %v1642 = vmul.f32 %v1602, %v1627
        %v1643 = vmul.f32 %v1603, %v1629
        %v1644 = vmul.f32 %v1604, %v1631
        %v1645 = vmul.f32 %v1605, %v1633
        %v1646 = vmul.f32 %v1606, %v1635
        %v1647 = vmul.f32 %v1607, %v1637
        %v1648 = vmul.f32 %v1608, %v1639
        %v1649 = vmul.f32 %v1609, %v1641
        %v1650 = vsub.f32 1.0, %v1642
        %v1651 = vsub.f32 1.0, %v1643
        %v1652 = vsub.f32 1.0, %v1644
        %v1653 = vsub.f32 1.0, %v1645
        %v1654 = vsub.f32 1.0, %v1646
        %v1655 = vsub.f32 1.0, %v1647
        %v1656 = vsub.f32 1.0, %v1648
        %v1657 = vsub.f32 1.0, %v1649
        %vm1658 = vcmp.lt.f32.partialorder %v1490, 0.0
        %vm1659 = vcmp.lt.f32.partialorder %v1491, 0.0
        %vm1660 = vcmp.lt.f32.partialorder %v1492, 0.0
        %vm1661 = vcmp.lt.f32.partialorder %v1493, 0.0
        %vm1662 = vcmp.lt.f32.partialorder %v1494, 0.0
        %vm1663 = vcmp.lt.f32.partialorder %v1495, 0.0
        %vm1664 = vcmp.lt.f32.partialorder %v1496, 0.0
        %vm1665 = vcmp.lt.f32.partialorder %v1497, 0.0
        %v1666 = vsub.f32 0.0, %v1650
        %v1667 = vsub.f32 0.0, %v1651
        %v1668 = vsub.f32 0.0, %v1652
        %v1669 = vsub.f32 0.0, %v1653
        %v1670 = vsub.f32 0.0, %v1654
        %v1671 = vsub.f32 0.0, %v1655
        %v1672 = vsub.f32 0.0, %v1656
        %v1673 = vsub.f32 0.0, %v1657
        %v1674 = vsel %vm1658, %v1666, %v1650
        %v1675 = vsel %vm1659, %v1667, %v1651
        %v1676 = vsel %vm1660, %v1668, %v1652
        %v1677 = vsel %vm1661, %v1669, %v1653
        %v1678 = vsel %vm1662, %v1670, %v1654
        %v1679 = vsel %vm1663, %v1671, %v1655
        %v1680 = vsel %vm1664, %v1672, %v1656
        %v1681 = vsel %vm1665, %v1673, %v1657
        %v1682 = vadd.f32 %v1674, 1.0
        %v1683 = vadd.f32 %v1675, 1.0
        %v1684 = vadd.f32 %v1676, 1.0
        %v1685 = vadd.f32 %v1677, 1.0
        %v1686 = vadd.f32 %v1678, 1.0
        %v1687 = vadd.f32 %v1679, 1.0
        %v1688 = vadd.f32 %v1680, 1.0
        %v1689 = vadd.f32 %v1681, 1.0
        %v1690 = vmul.f32 %v1482, %v1682
        %v1691 = vmul.f32 %v1483, %v1683
        %v1692 = vmul.f32 %v1484, %v1684
        %v1693 = vmul.f32 %v1485, %v1685
        %v1694 = vmul.f32 %v1486, %v1686
        %v1695 = vmul.f32 %v1487, %v1687
        %v1696 = vmul.f32 %v1488, %v1688
        %v1697 = vmul.f32 %v1489, %v1689
        %1698 = vst.msk [vmem:[%s294] sm:$0xff] %vm1346, %v1690
        %1699 = vst.msk [vmem:[%s294 + $0x8] sm:$0xff] %vm1346, %v1691
        %1700 = vst.msk [vmem:[%s294 + $0x10] sm:$0xff] %vm1346, %v1692
        %1701 = vst.msk [vmem:[%s294 + $0x18] sm:$0xff] %vm1346, %v1693
        %1702 = vst.msk [vmem:[%s294 + $0x20] sm:$0xff] %vm1346, %v1694
        %1703 = vst.msk [vmem:[%s294 + $0x28] sm:$0xff] %vm1346, %v1695
        %1704 = vst.msk [vmem:[%s294 + $0x30] sm:$0xff] %vm1346, %v1696
        %1705 = vst.msk [vmem:[%s294 + $0x38] sm:$0xff] %vm1346, %v1697
        %s1706 = sand.u32 %s142, 1
        %s1707 = scalar_lea.sflag [#allocation4], %s1706
        %s1708 = sand.u32 %s142, 1
        %s1709 = smul.addr %s1708, 64
        %s1710 = scalar_lea.vmem [#allocation11], %s1709
        // Predicated region
        $region61: #{tpu_custom_call.1} parent=39 // pred_check
          %p1711 = pneg %p152
        $region62: #{tpu_custom_call.1} parent=39 // pred_check_branch
          %1713 = sbr.rel (%p1711) target = $region64
        $region63: #{tpu_custom_call.1} parent=39 // pred_region
          %s1715 = ssub.s32 1024, 1024
          %1716 = vsyncadd %s1707, %s1715
          %s1717 = smul.addr %s24, 8
          %s1718 = smul.addr %s1717, 128
          %s1719 = scalar_lea.hbm %s5, %s1718
          %s1720 = sshll.u32 %s1710, 4
          %s1721 = int_to_ptr.vmem [resolvable:$true] %s1720
          %1726 = dma.vmem_to_hbm [thread:$0]  %s1721, 1024, %s1719, %s1707, 128, 128, 8
        $region64: #{tpu_custom_call.1} parent=39 // pred_fallthru
          _
      $region40: #{tpu_custom_call.1} parent=5 // pred_fallthru
        _
      %p1727 = scmp.le.s32.totalorder 2, %s19
      // Predicated region
      $region65: #{tpu_custom_call.1} parent=5 // pred_check
        %p1728 = pneg %p1727
      $region66: #{tpu_custom_call.1} parent=5 // pred_check_branch
        %1730 = sbr.rel (%p1728) target = $region68
      $region67: #{tpu_custom_call.1} parent=5 // pred_region
        %s1731 = ssub.s32 %s19, 2
        // Predicated region
        $region69: #{tpu_custom_call.1} parent=67 // pred_check
          %p1732 = pneg %p158
        $region70: #{tpu_custom_call.1} parent=67 // pred_check_branch
          %1734 = sbr.rel (%p1732) target = $region72
        $region71: #{tpu_custom_call.1} parent=67 // pred_region
          %s1735 = sand.u32 %s143, 1
          %s1736 = scalar_lea.sflag [#allocation4], %s1735
          %s1737 = sand.u32 %s143, 1
          %s1738 = smul.addr %s1737, 64
          %s1739 = scalar_lea.vmem [#allocation11], %s1738
          %1740 = dma.done %s1736, 1024
        $region72: #{tpu_custom_call.1} parent=67 // pred_fallthru
          _
      $region68: #{tpu_custom_call.1} parent=5 // pred_fallthru
        _
    $region6: #{tpu_custom_call.1} parent=1 // loop_footer
      %s23 = sadd.s32 1, %s19
    $region7: #{tpu_custom_call.1} parent=1 // loop_footer_branch
      %18 = sbr.rel target = $region3
    $region8: #{tpu_custom_call.1} parent=1 // loop_exit
      _
    %1741 = vsyncpa [#allocation3], 1
    %s1742 = scalar_lea.sflag [#allocation3], 1
    %1743 = vsyncpa %s1742, 1
    %1744 = vsyncpa [#allocation6], 1
    %1745 = vsyncpa [#allocation9], 1
    %1746 = vsyncpa [#allocation4], 1
    %s1747 = scalar_lea.sflag [#allocation4], 1
    %1748 = vsyncpa %s1747, 1

</llo_original>
